<compile_context>
chip_gen: v7x
topology: tpu7x:2x2x1
jax: 0.10.0
libtpu: 0.0.40
codegen_flags: <defaults>
</compile_context>

<pallas_src>
import functools

import jax
import jax.numpy as jnp
from jax.experimental import pallas as pl
from jax.experimental.pallas import tpu as pltpu


def _im2col_3x3(v, H, W, C):
  """(H, W, C) -> (H*W, 9*C) patches of the zero-padded 3x3 neighbourhood.

  Result channel order: k = dx*3*C + dy*C + c, i.e. value at (h*W+w, k) is
  v[h+dy-1, w+dx-1, c] (zero outside the image). Weights must be reordered to
  match (see _reorder_weight).
  """
  zr = jnp.zeros((1, W, C), v.dtype)
  rows = jnp.concatenate([
      jnp.concatenate([zr, v[:H - 1]], axis=0),   # dy = 0 -> input row h-1
      v,                                          # dy = 1
      jnp.concatenate([v[1:], zr], axis=0),       # dy = 2 -> input row h+1
  ], axis=-1)                                     # (H, W, 3C)
  zc = jnp.zeros((H, 1, 3 * C), v.dtype)
  p = jnp.concatenate([
      jnp.concatenate([zc, rows[:, :W - 1]], axis=1),  # dx = 0 -> col w-1
      rows,                                            # dx = 1
      jnp.concatenate([rows[:, 1:], zc], axis=1),      # dx = 2 -> col w+1
  ], axis=-1)                                          # (H, W, 9C)
  return p.reshape(H * W, 9 * C)


def _upconv_kernel(x2_ref, x1_ref, w1_ref, s1_ref, b1_ref, w2_ref, s2_ref,
                   b2_ref, out_ref):
  """Fused [concat -> conv3x3 -> BN -> ReLU -> conv3x3 -> BN -> ReLU], one batch elem.

  x2_ref : (1, H, W, C2)      bf16 skip connection
  x1_ref : (1, H, W, C1)      bf16 upsampled coarse features
  w1_ref : (9*(C2+C1), Cmid)  bf16 im2col-reordered conv1 weight
  s1/b1  : (1, Cmid) f32      folded BN1 scale / bias (conv1 bias folded in)
  w2_ref : (9*Cmid, Cout)     bf16 im2col-reordered conv2 weight
  s2/b2  : (1, Cout) f32      folded BN2 scale / bias
  out_ref: (1, Cout, H*W) f32 lane-dense, NCHW-compatible output slab
  """
  H, W, C2 = x2_ref.shape[1], x2_ref.shape[2], x2_ref.shape[3]
  C1 = x1_ref.shape[3]
  Cin = C2 + C1
  Cmid = w1_ref.shape[1]
  Cout = w2_ref.shape[1]
  cdt = x2_ref.dtype  # bf16 compute dtype

  # Channel concat (torch.cat([x2, x1], dim=1)) fused in VMEM — no HBM round trip.
  x = jnp.concatenate([x2_ref[0], x1_ref[0]], axis=-1)          # (H, W, Cin)

  # conv1: single MXU matmul, K = 9*Cin, f32 accumulation, folded BN + ReLU.
  p1 = _im2col_3x3(x, H, W, Cin)                                # (H*W, 9*Cin)
  acc1 = jnp.dot(p1, w1_ref[...], preferred_element_type=jnp.float32)
  h1 = jnp.maximum(acc1 * s1_ref[...] + b1_ref[...], 0.0)       # (H*W, Cmid) f32

  # conv2 on the intermediate kept as a value (no padded scratch, no zero-fill).
  p2 = _im2col_3x3(h1.astype(cdt).reshape(H, W, Cmid), H, W, Cmid)
  acc2 = jnp.dot(p2, w2_ref[...], preferred_element_type=jnp.float32)
  h2 = jnp.maximum(acc2 * s2_ref[...] + b2_ref[...], 0.0)       # (H*W, Cout) f32

  # Lane-dense output (Cout, H*W): pad the tiny channel dim up to 128 lanes so the
  # 2-D transpose is tile-aligned, then slice the real channels back out. The store
  # itself is full-lane (H*W on lanes) -> unmasked vst.
  cp = ((Cout + 127) // 128) * 128
  h2p = h2 if cp == Cout else jnp.concatenate(
      [h2, jnp.zeros((H * W, cp - Cout), h2.dtype)], axis=-1)
  out_ref[0] = h2p.T[:Cout, :]


def _fused_double_conv(x2, x1, w1r, s1, b1, w2r, s2, b2):
  N, H, W, C2 = x2.shape
  C1 = x1.shape[3]
  Cin = C2 + C1
  Cmid = w1r.shape[1]
  Cout = w2r.shape[1]
  return pl.pallas_call(
      _upconv_kernel,
      out_shape=jax.ShapeDtypeStruct((N, Cout, H * W), jnp.float32),
      grid_spec=pltpu.PrefetchScalarGridSpec(
          num_scalar_prefetch=0,
          grid=(N,),
          in_specs=[
              pl.BlockSpec((1, H, W, C2), lambda n: (n, 0, 0, 0)),
              pl.BlockSpec((1, H, W, C1), lambda n: (n, 0, 0, 0)),
              pl.BlockSpec((9 * Cin, Cmid), lambda n: (0, 0)),
              pl.BlockSpec((1, Cmid), lambda n: (0, 0)),
              pl.BlockSpec((1, Cmid), lambda n: (0, 0)),
              pl.BlockSpec((9 * Cmid, Cout), lambda n: (0, 0)),
              pl.BlockSpec((1, Cout), lambda n: (0, 0)),
              pl.BlockSpec((1, Cout), lambda n: (0, 0)),
          ],
          out_specs=pl.BlockSpec((1, Cout, H * W), lambda n: (n, 0, 0)),
      ),
      compiler_params=pltpu.CompilerParams(
          dimension_semantics=("parallel",),
          vmem_limit_bytes=64 * 1024 * 1024),
  )(x2, x1, w1r, s1, b1, w2r, s2, b2)


def _bilinear_up2_align_corners(x):
  """nn.Upsample(scale_factor=2, mode='bilinear', align_corners=True), NHWC f32."""
  n, h, w, c = x.shape
  ho, wo = 2 * h, 2 * w

  def idx(sz_in, sz_out):
    if sz_in == 1 or sz_out == 1:
      lo = jnp.zeros((sz_out,), jnp.int32)
      return lo, lo, jnp.zeros((sz_out,), jnp.float32)
    src = jnp.arange(sz_out, dtype=jnp.float32) * (sz_in - 1) / (sz_out - 1)
    lo = jnp.clip(jnp.floor(src).astype(jnp.int32), 0, sz_in - 1)
    hi = jnp.minimum(lo + 1, sz_in - 1)
    fr = src - lo.astype(jnp.float32)
    return lo, hi, fr

  ylo, yhi, yfr = idx(h, ho)
  xlo, xhi, xfr = idx(w, wo)

  top = x[:, ylo]
  bot = x[:, yhi]
  yfr_b = yfr[None, :, None, None]
  xy = top * (1.0 - yfr_b) + bot * yfr_b
  left = xy[:, :, xlo]
  right = xy[:, :, xhi]
  xfr_b = xfr[None, None, :, None]
  return left * (1.0 - xfr_b) + right * xfr_b


def _fold_bn(conv_bias, gamma, beta, mean, var, eps=1e-5):
  scale = gamma / jnp.sqrt(var + eps)
  bias = beta + (conv_bias - mean) * scale
  return scale.reshape(1, -1), bias.reshape(1, -1)


def _reorder_weight(w):
  """(3,3,Ci,Co)[dy,dx,c,o] -> (9*Ci,Co)[dx*3*Ci + dy*Ci + c, o], cast to bf16."""
  kh, kw, ci, co = w.shape
  return jnp.transpose(w, (1, 0, 2, 3)).reshape(kh * kw * ci, co).astype(jnp.bfloat16)


def init_params(key, in_channels, out_channels):
  cmid = in_channels // 2
  ks = jax.random.split(key, 12)
  return {
      "w1": 0.1 * jax.random.normal(ks[0], (3, 3, in_channels, cmid), jnp.float32),
      "b1": 0.05 * jax.random.normal(ks[1], (cmid,), jnp.float32),
      "bn1_gamma": 1.0 + 0.1 * jax.random.normal(ks[2], (cmid,), jnp.float32),
      "bn1_beta": 0.05 * jax.random.normal(ks[3], (cmid,), jnp.float32),
      "bn1_mean": 0.02 * jax.random.normal(ks[4], (cmid,), jnp.float32),
      "bn1_var": 1.0 + 0.1 * jax.random.uniform(ks[5], (cmid,), jnp.float32),
      "w2": 0.1 * jax.random.normal(ks[6], (3, 3, cmid, out_channels), jnp.float32),
      "b2": 0.05 * jax.random.normal(ks[7], (out_channels,), jnp.float32),
      "bn2_gamma": 1.0 + 0.1 * jax.random.normal(ks[8], (out_channels,), jnp.float32),
      "bn2_beta": 0.05 * jax.random.normal(ks[9], (out_channels,), jnp.float32),
      "bn2_mean": 0.02 * jax.random.normal(ks[10], (out_channels,), jnp.float32),
      "bn2_var": 1.0 + 0.1 * jax.random.uniform(ks[11], (out_channels,), jnp.float32),
  }


def upsampling_forward(x1, x2, params):
  """Equivalent of Upsampling.forward. x1, x2, result are NCHW float32."""
  # NCHW -> NHWC for the two inputs (channels onto the TPU lane axis).
  # TODO(synk): carry NHWC through the surrounding model to drop these transposes;
  # the output side already avoids one by writing an NCHW-compatible (N,Cout,H*W) slab.
  x1 = jnp.transpose(x1, (0, 2, 3, 1))
  x2 = jnp.transpose(x2, (0, 2, 3, 1))

  x1 = _bilinear_up2_align_corners(x1)
  diffy = x2.shape[1] - x1.shape[1]
  diffx = x2.shape[2] - x1.shape[2]
  if diffy or diffx:
    x1 = jnp.pad(x1, ((0, 0), (diffy // 2, diffy - diffy // 2),
                      (diffx // 2, diffx - diffx // 2), (0, 0)))

  N, H, W, _ = x2.shape
  Cout = params["w2"].shape[3]

  s1, b1 = _fold_bn(params["b1"], params["bn1_gamma"], params["bn1_beta"],
                    params["bn1_mean"], params["bn1_var"])
  s2, b2 = _fold_bn(params["b2"], params["bn2_gamma"], params["bn2_beta"],
                    params["bn2_mean"], params["bn2_var"])
  w1r = _reorder_weight(params["w1"])
  w2r = _reorder_weight(params["w2"])

  out = _fused_double_conv(x2.astype(jnp.bfloat16), x1.astype(jnp.bfloat16),
                           w1r, s1, b1, w2r, s2, b2)
  # (N, Cout, H*W) -> NCHW: a free reshape, no transpose.
  return out.reshape(N, Cout, H, W)


def _reference_forward(x1, x2, params, eps=1e-5):
  """Pure-JAX f32 reference (XLA conv) for correctness checking."""
  x1 = jnp.transpose(x1, (0, 2, 3, 1))
  x2 = jnp.transpose(x2, (0, 2, 3, 1))
  x1 = _bilinear_up2_align_corners(x1)
  x = jnp.concatenate([x2, x1], axis=-1)

  def conv_bn_relu(x, w, b, g, beta, mean, var):
    y = jax.lax.conv_general_dilated(
        x, w, window_strides=(1, 1), padding="SAME",
        dimension_numbers=("NHWC", "HWIO", "NHWC")) + b
    y = (y - mean) / jnp.sqrt(var + eps) * g + beta
    return jnp.maximum(y, 0.0)

  y = conv_bn_relu(x, params["w1"], params["b1"], params["bn1_gamma"],
                   params["bn1_beta"], params["bn1_mean"], params["bn1_var"])
  y = conv_bn_relu(y, params["w2"], params["b2"], params["bn2_gamma"],
                   params["bn2_beta"], params["bn2_mean"], params["bn2_var"])
  return jnp.transpose(y, (0, 3, 1, 2))


if __name__ == "__main__":
  in_channels, out_channels = 8, 4  # concat channels = in_channels
  key = jax.random.PRNGKey(0)
  kp, k1, k2 = jax.random.split(key, 3)

  params = init_params(kp, in_channels, out_channels)
  # x1: coarse feature map (half spatial, in_channels//2 channels), NCHW.
  x1 = jax.random.normal(k1, (2, in_channels // 2, 8, 8), jnp.float32)
  # x2: skip connection (full spatial, in_channels//2 channels), NCHW.
  x2 = jax.random.normal(k2, (2, in_channels // 2, 16, 16), jnp.float32)

  fwd = jax.jit(functools.partial(upsampling_forward, params=params))
  out = fwd(x1, x2)
  jax.block_until_ready(out)
  assert out.shape == (2, out_channels, 16, 16), out.shape
  assert bool(jnp.all(jnp.isfinite(out)))

  # Loose tolerance: kernel uses bf16 activations/weights with f32 accumulation.
  ref = _reference_forward(x1, x2, params)
  max_err = float(jnp.max(jnp.abs(out - ref)))
  assert max_err < 0.15, f"max abs error vs f32 reference: {max_err}"

  print("KERNEL_OK")
</pallas_src>

<mosaic_0001>
module attributes {stable_mosaic.version = 11 : i64} {
  func.func @_upconv_kernel(%arg0: i32, %arg1: memref<1x16x16x4xbf16, #tpu.memory_space<vmem>>, %arg2: memref<1x16x16x4xbf16, #tpu.memory_space<vmem>>, %arg3: memref<72x4xbf16, #tpu.memory_space<vmem>>, %arg4: memref<1x4xf32, #tpu.memory_space<vmem>>, %arg5: memref<1x4xf32, #tpu.memory_space<vmem>>, %arg6: memref<36x4xbf16, #tpu.memory_space<vmem>>, %arg7: memref<1x4xf32, #tpu.memory_space<vmem>>, %arg8: memref<1x4xf32, #tpu.memory_space<vmem>>, %arg9: memref<1x4x256xf32, #tpu.memory_space<vmem>>) attributes {dimension_semantics = [#tpu.dimension_semantics<parallel>], iteration_bounds = array<i64: 2>, scalar_prefetch = 0 : i64, scratch_operands = 0 : i64, tpu.core_type = #tpu.core_type<tc>, window_params = [{transform_indices = @transform_0, window_bounds = array<i64: 1, 16, 16, 4>}, {transform_indices = @transform_1, window_bounds = array<i64: 1, 16, 16, 4>}, {pipeline_mode = #tpu.pipeline_mode<synchronous>, transform_indices = @transform_2, window_bounds = array<i64: 72, 4>}, {pipeline_mode = #tpu.pipeline_mode<synchronous>, transform_indices = @transform_3, window_bounds = array<i64: 1, 4>}, {pipeline_mode = #tpu.pipeline_mode<synchronous>, transform_indices = @transform_4, window_bounds = array<i64: 1, 4>}, {pipeline_mode = #tpu.pipeline_mode<synchronous>, transform_indices = @transform_5, window_bounds = array<i64: 36, 4>}, {pipeline_mode = #tpu.pipeline_mode<synchronous>, transform_indices = @transform_6, window_bounds = array<i64: 1, 4>}, {pipeline_mode = #tpu.pipeline_mode<synchronous>, transform_indices = @transform_7, window_bounds = array<i64: 1, 4>}, {transform_indices = @transform_8, window_bounds = array<i64: 1, 4, 256>}]} {
    %c0 = arith.constant 0 : index
    %c0_0 = arith.constant 0 : index
    %c0_1 = arith.constant 0 : index
    %c0_2 = arith.constant 0 : index
    %0 = vector.load %arg1[%c0, %c0_0, %c0_1, %c0_2] : memref<1x16x16x4xbf16, #tpu.memory_space<vmem>>, vector<1x16x16x4xbf16>
    %1 = vector.shape_cast %0 : vector<1x16x16x4xbf16> to vector<16x16x4xbf16>
    %c0_3 = arith.constant 0 : index
    %c0_4 = arith.constant 0 : index
    %c0_5 = arith.constant 0 : index
    %c0_6 = arith.constant 0 : index
    %2 = vector.load %arg2[%c0_3, %c0_4, %c0_5, %c0_6] : memref<1x16x16x4xbf16, #tpu.memory_space<vmem>>, vector<1x16x16x4xbf16>
    %3 = vector.shape_cast %2 : vector<1x16x16x4xbf16> to vector<16x16x4xbf16>
    %4 = tpu.concatenate %1, %3 in 2 : vector<16x16x4xbf16>, vector<16x16x4xbf16> -> vector<16x16x8xbf16>
    %cst = arith.constant 0.000000e+00 : bf16
    %5 = vector.broadcast %cst : bf16 to vector<1x16x8xbf16>
    %6 = vector.extract_strided_slice %4 {offsets = [0, 0, 0], sizes = [15, 16, 8], strides = [1, 1, 1]} : vector<16x16x8xbf16> to vector<15x16x8xbf16>
    %7 = tpu.concatenate %5, %6 in 0 : vector<1x16x8xbf16>, vector<15x16x8xbf16> -> vector<16x16x8xbf16>
    %8 = vector.extract_strided_slice %4 {offsets = [1, 0, 0], sizes = [15, 16, 8], strides = [1, 1, 1]} : vector<16x16x8xbf16> to vector<15x16x8xbf16>
    %9 = tpu.concatenate %8, %5 in 0 : vector<15x16x8xbf16>, vector<1x16x8xbf16> -> vector<16x16x8xbf16>
    %10 = tpu.concatenate %7, %4, %9 in 2 : vector<16x16x8xbf16>, vector<16x16x8xbf16>, vector<16x16x8xbf16> -> vector<16x16x24xbf16>
    %cst_7 = arith.constant 0.000000e+00 : bf16
    %11 = vector.broadcast %cst_7 : bf16 to vector<16x1x24xbf16>
    %12 = vector.extract_strided_slice %10 {offsets = [0, 0, 0], sizes = [16, 15, 24], strides = [1, 1, 1]} : vector<16x16x24xbf16> to vector<16x15x24xbf16>
    %13 = tpu.concatenate %11, %12 in 1 : vector<16x1x24xbf16>, vector<16x15x24xbf16> -> vector<16x16x24xbf16>
    %14 = vector.extract_strided_slice %10 {offsets = [0, 1, 0], sizes = [16, 15, 24], strides = [1, 1, 1]} : vector<16x16x24xbf16> to vector<16x15x24xbf16>
    %15 = tpu.concatenate %14, %11 in 1 : vector<16x15x24xbf16>, vector<16x1x24xbf16> -> vector<16x16x24xbf16>
    %16 = tpu.concatenate %13, %10, %15 in 2 : vector<16x16x24xbf16>, vector<16x16x24xbf16>, vector<16x16x24xbf16> -> vector<16x16x72xbf16>
    %17 = vector.shape_cast %16 : vector<16x16x72xbf16> to vector<256x72xbf16>
    %c0_8 = arith.constant 0 : index
    %c0_9 = arith.constant 0 : index
    %18 = vector.load %arg3[%c0_8, %c0_9] : memref<72x4xbf16, #tpu.memory_space<vmem>>, vector<72x4xbf16>
    %cst_10 = arith.constant dense<0.000000e+00> : vector<256x4xf32>
    %19 = tpu.matmul %17, %18, %cst_10 {dimension_numbers = #tpu.dot_dimension_numbers<[1], [0], [0], [1], [0, 0, 1, 1], [], []>} : vector<256x72xbf16>, vector<72x4xbf16>, vector<256x4xf32> -> vector<256x4xf32>
    %c0_11 = arith.constant 0 : index
    %c0_12 = arith.constant 0 : index
    %20 = vector.load %arg4[%c0_11, %c0_12] : memref<1x4xf32, #tpu.memory_space<vmem>>, vector<1x4xf32>
    %21 = vector.broadcast %20 : vector<1x4xf32> to vector<256x4xf32>
    %22 = arith.mulf %19, %21 : vector<256x4xf32>
    %c0_13 = arith.constant 0 : index
    %c0_14 = arith.constant 0 : index
    %23 = vector.load %arg5[%c0_13, %c0_14] : memref<1x4xf32, #tpu.memory_space<vmem>>, vector<1x4xf32>
    %24 = vector.broadcast %23 : vector<1x4xf32> to vector<256x4xf32>
    %25 = arith.addf %22, %24 : vector<256x4xf32>
    %cst_15 = arith.constant 0.000000e+00 : f32
    %26 = vector.broadcast %cst_15 : f32 to vector<256x4xf32>
    %27 = arith.maximumf %25, %26 : vector<256x4xf32>
    %28 = arith.truncf %27 : vector<256x4xf32> to vector<256x4xbf16>
    %29 = vector.shape_cast %28 : vector<256x4xbf16> to vector<16x16x4xbf16>
    %cst_16 = arith.constant 0.000000e+00 : bf16
    %30 = vector.broadcast %cst_16 : bf16 to vector<1x16x4xbf16>
    %31 = vector.extract_strided_slice %29 {offsets = [0, 0, 0], sizes = [15, 16, 4], strides = [1, 1, 1]} : vector<16x16x4xbf16> to vector<15x16x4xbf16>
    %32 = tpu.concatenate %30, %31 in 0 : vector<1x16x4xbf16>, vector<15x16x4xbf16> -> vector<16x16x4xbf16>
    %33 = vector.extract_strided_slice %29 {offsets = [1, 0, 0], sizes = [15, 16, 4], strides = [1, 1, 1]} : vector<16x16x4xbf16> to vector<15x16x4xbf16>
    %34 = tpu.concatenate %33, %30 in 0 : vector<15x16x4xbf16>, vector<1x16x4xbf16> -> vector<16x16x4xbf16>
    %35 = tpu.concatenate %32, %29, %34 in 2 : vector<16x16x4xbf16>, vector<16x16x4xbf16>, vector<16x16x4xbf16> -> vector<16x16x12xbf16>
    %cst_17 = arith.constant 0.000000e+00 : bf16
    %36 = vector.broadcast %cst_17 : bf16 to vector<16x1x12xbf16>
    %37 = vector.extract_strided_slice %35 {offsets = [0, 0, 0], sizes = [16, 15, 12], strides = [1, 1, 1]} : vector<16x16x12xbf16> to vector<16x15x12xbf16>
    %38 = tpu.concatenate %36, %37 in 1 : vector<16x1x12xbf16>, vector<16x15x12xbf16> -> vector<16x16x12xbf16>
    %39 = vector.extract_strided_slice %35 {offsets = [0, 1, 0], sizes = [16, 15, 12], strides = [1, 1, 1]} : vector<16x16x12xbf16> to vector<16x15x12xbf16>
    %40 = tpu.concatenate %39, %36 in 1 : vector<16x15x12xbf16>, vector<16x1x12xbf16> -> vector<16x16x12xbf16>
    %41 = tpu.concatenate %38, %35, %40 in 2 : vector<16x16x12xbf16>, vector<16x16x12xbf16>, vector<16x16x12xbf16> -> vector<16x16x36xbf16>
    %42 = vector.shape_cast %41 : vector<16x16x36xbf16> to vector<256x36xbf16>
    %c0_18 = arith.constant 0 : index
    %c0_19 = arith.constant 0 : index
    %43 = vector.load %arg6[%c0_18, %c0_19] : memref<36x4xbf16, #tpu.memory_space<vmem>>, vector<36x4xbf16>
    %cst_20 = arith.constant dense<0.000000e+00> : vector<256x4xf32>
    %44 = tpu.matmul %42, %43, %cst_20 {dimension_numbers = #tpu.dot_dimension_numbers<[1], [0], [0], [1], [0, 0, 1, 1], [], []>} : vector<256x36xbf16>, vector<36x4xbf16>, vector<256x4xf32> -> vector<256x4xf32>
    %c0_21 = arith.constant 0 : index
    %c0_22 = arith.constant 0 : index
    %45 = vector.load %arg7[%c0_21, %c0_22] : memref<1x4xf32, #tpu.memory_space<vmem>>, vector<1x4xf32>
    %46 = vector.broadcast %45 : vector<1x4xf32> to vector<256x4xf32>
    %47 = arith.mulf %44, %46 : vector<256x4xf32>
    %c0_23 = arith.constant 0 : index
    %c0_24 = arith.constant 0 : index
    %48 = vector.load %arg8[%c0_23, %c0_24] : memref<1x4xf32, #tpu.memory_space<vmem>>, vector<1x4xf32>
    %49 = vector.broadcast %48 : vector<1x4xf32> to vector<256x4xf32>
    %50 = arith.addf %47, %49 : vector<256x4xf32>
    %cst_25 = arith.constant 0.000000e+00 : f32
    %51 = vector.broadcast %cst_25 : f32 to vector<256x4xf32>
    %52 = arith.maximumf %50, %51 : vector<256x4xf32>
    %cst_26 = arith.constant 0.000000e+00 : f32
    %53 = vector.broadcast %cst_26 : f32 to vector<256x124xf32>
    %54 = tpu.concatenate %52, %53 in 1 : vector<256x4xf32>, vector<256x124xf32> -> vector<256x128xf32>
    %55 = tpu.transpose %54, [1, 0] : vector<256x128xf32> -> vector<128x256xf32>
    %56 = vector.extract_strided_slice %55 {offsets = [0, 0], sizes = [4, 256], strides = [1, 1]} : vector<128x256xf32> to vector<4x256xf32>
    %c0_27 = arith.constant 0 : index
    %c0_28 = arith.constant 0 : index
    %c0_29 = arith.constant 0 : index
    %57 = vector.load %arg9[%c0_27, %c0_28, %c0_29] : memref<1x4x256xf32, #tpu.memory_space<vmem>>, vector<1x4x256xf32>
    %58 = vector.shape_cast %57 : vector<1x4x256xf32> to vector<4x256xf32>
    %59 = vector.shape_cast %56 : vector<4x256xf32> to vector<1x4x256xf32>
    tpu.vector_store %arg9[%c0_27, %c0_28, %c0_29], %59 {strides = array<i32>} : memref<1x4x256xf32, #tpu.memory_space<vmem>>, vector<1x4x256xf32>,
    return
  }
  func.func @transform_0(%arg0: i32) -> (i32, i32, i32, i32) {
    %c0_i32 = arith.constant 0 : i32
    %c0_i32_0 = arith.constant 0 : i32
    %c0_i32_1 = arith.constant 0 : i32
    %c0_i32_2 = arith.constant 0 : i32
    return %arg0, %c0_i32, %c0_i32_0, %c0_i32_1 : i32, i32, i32, i32
  }
  func.func @transform_1(%arg0: i32) -> (i32, i32, i32, i32) {
    %c0_i32 = arith.constant 0 : i32
    %c0_i32_0 = arith.constant 0 : i32
    %c0_i32_1 = arith.constant 0 : i32
    %c0_i32_2 = arith.constant 0 : i32
    return %arg0, %c0_i32, %c0_i32_0, %c0_i32_1 : i32, i32, i32, i32
  }
  func.func @transform_2(%arg0: i32) -> (i32, i32) {
    %c0_i32 = arith.constant 0 : i32
    %c0_i32_0 = arith.constant 0 : i32
    %c0_i32_1 = arith.constant 0 : i32
    return %c0_i32, %c0_i32_0 : i32, i32
  }
  func.func @transform_3(%arg0: i32) -> (i32, i32) {
    %c0_i32 = arith.constant 0 : i32
    %c0_i32_0 = arith.constant 0 : i32
    %c0_i32_1 = arith.constant 0 : i32
    return %c0_i32, %c0_i32_0 : i32, i32
  }
  func.func @transform_4(%arg0: i32) -> (i32, i32) {
    %c0_i32 = arith.constant 0 : i32
    %c0_i32_0 = arith.constant 0 : i32
    %c0_i32_1 = arith.constant 0 : i32
    return %c0_i32, %c0_i32_0 : i32, i32
  }
  func.func @transform_5(%arg0: i32) -> (i32, i32) {
    %c0_i32 = arith.constant 0 : i32
    %c0_i32_0 = arith.constant 0 : i32
    %c0_i32_1 = arith.constant 0 : i32
    return %c0_i32, %c0_i32_0 : i32, i32
  }
  func.func @transform_6(%arg0: i32) -> (i32, i32) {
    %c0_i32 = arith.constant 0 : i32
    %c0_i32_0 = arith.constant 0 : i32
    %c0_i32_1 = arith.constant 0 : i32
    return %c0_i32, %c0_i32_0 : i32, i32
  }
  func.func @transform_7(%arg0: i32) -> (i32, i32) {
    %c0_i32 = arith.constant 0 : i32
    %c0_i32_0 = arith.constant 0 : i32
    %c0_i32_1 = arith.constant 0 : i32
    return %c0_i32, %c0_i32_0 : i32, i32
  }
  func.func @transform_8(%arg0: i32) -> (i32, i32, i32) {
    %c0_i32 = arith.constant 0 : i32
    %c0_i32_0 = arith.constant 0 : i32
    %c0_i32_1 = arith.constant 0 : i32
    return %arg0, %c0_i32, %c0_i32_0 : i32, i32, i32
  }
}

</mosaic_0001>

<llo_original>
// kernel: upsampling_forward.1
$region0: #{upsampling_forward.1}
  #allocation0 [shape = 'u32[]', space=smem, size = 0x4, offset = 0x4, fixed_abs, tag = 'smem constant byte address 0x4 - core index']
  #allocation1 [shape = 'u32[144,128]{1,0:T(1,128)}', space=vmem, size = 0x12000, scoped, tag = 'internal scratch']
  %s0 = inlined_call_operand.hbm [shape: bf16[2,16,16,4], index: 0, kind: input, shape index: {}]
  %s1 = inlined_call_operand.hbm [shape: bf16[2,16,16,4], index: 1, kind: input, shape index: {}]
  %s2 = inlined_call_operand.hbm [shape: bf16[72,4], index: 2, kind: input, shape index: {}]
  %s3 = inlined_call_operand.hbm [shape: f32[1,4], index: 3, kind: input, shape index: {}]
  %s4 = inlined_call_operand.hbm [shape: f32[1,4], index: 4, kind: input, shape index: {}]
  %s5 = inlined_call_operand.hbm [shape: bf16[36,4], index: 5, kind: input, shape index: {}]
  %s6 = inlined_call_operand.hbm [shape: f32[1,4], index: 6, kind: input, shape index: {}]
  %s7 = inlined_call_operand.hbm [shape: f32[1,4], index: 7, kind: input, shape index: {}]
  %s8 = inlined_call_operand.hbm [shape: f32[2,4,256], index: 8, kind: output, shape index: {}]
  %s9 = sld [smem:[#allocation0]]
  $region97: #{upsampling_forward.1} parent=0
    _
  %s11 = ssub.s32 1, %s9
  %s12 = scalar_select 0, %s11, %s9
  $region1: #{upsampling_forward.1} parent=0
    #allocation2 [shape = 'u8[131072]{0}', space=vmem, size = 0x20000, scoped, tag = 'input window, operand 0']
    #allocation3 [shape = 's32[2]{0}', space=sflag, size = 0x8, scoped, tag = 'scoped memory for upsampling_forward.1']
    #allocation4 [shape = 's32[2]{0}', space=sflag, size = 0x8, scoped, tag = 'scoped memory for upsampling_forward.1']
    #allocation5 [shape = 'u8[131072]{0}', space=vmem, size = 0x20000, scoped, tag = 'input window, operand 1']
    #allocation6 [shape = 's32[2]{0}', space=sflag, size = 0x8, scoped, tag = 'scoped memory for upsampling_forward.1']
    #allocation7 [shape = 'u8[18432]{0}', space=vmem, size = 0x4800, scoped, tag = 'input window, operand 2, single buffered']
    #allocation8 [shape = 'u8[512]{0}', space=vmem, size = 0x400, scoped, tag = 'input window, operand 3, single buffered']
    #allocation9 [shape = 's32[1]{0}', space=sflag, size = 0x4, scoped, tag = 'scoped memory for upsampling_forward.1']
    #allocation10 [shape = 'u8[512]{0}', space=vmem, size = 0x400, scoped, tag = 'input window, operand 4, single buffered']
    #allocation11 [shape = 'u8[10240]{0}', space=vmem, size = 0x2800, scoped, tag = 'input window, operand 5, single buffered']
    #allocation12 [shape = 's32[1]{0}', space=sflag, size = 0x4, scoped, tag = 'scoped memory for upsampling_forward.1']
    #allocation13 [shape = 'u8[512]{0}', space=vmem, size = 0x400, scoped, tag = 'input window, operand 6, single buffered']
    #allocation14 [shape = 'u8[512]{0}', space=vmem, size = 0x400, scoped, tag = 'input window, operand 7, single buffered']
    #allocation15 [shape = 's32[1]{0}', space=sflag, size = 0x4, scoped, tag = 'scoped memory for upsampling_forward.1']
    #allocation16 [shape = 'u8[8192]{0}', space=vmem, size = 0x2000, scoped, tag = 'output window, operand 0']
    %13 = vsyncpa [#allocation3], 0
    %s14 = scalar_lea.sflag [#allocation3], 1
    %15 = vsyncpa %s14, 0
    %16 = vsyncpa [#allocation6], 0
    %s17 = scalar_lea.sflag [#allocation6], 1
    %18 = vsyncpa %s17, 0
    %19 = vsyncpa [#allocation9], 0
    %20 = vsyncpa [#allocation12], 0
    %21 = vsyncpa [#allocation15], 0
    %22 = vsyncpa [#allocation4], 0
    %s23 = scalar_lea.sflag [#allocation4], 1
    %24 = vsyncpa %s23, 0
    loop: start=0, step=1, limit=4
    $region2: #{upsampling_forward.1} parent=1 // loop_pre_header
      _
    $region3: #{upsampling_forward.1} parent=1 // loop_header
      %s26 = sphi 0, %s30
      %p27 = scmp.ge.s32.totalorder %s26, 4
      %s36 = sphi 0, %s38
      %s39 = sphi 0, %s36
      %s40 = sphi 0, %s39
      %s56 = sphi 0, %s40
      %s62 = sphi 0, %s64
      %s65 = sphi 0, %s62
      %s66 = sphi 0, %s65
      %s82 = sphi 0, %s66
      %s86 = sphi 0, %s86
      %s88 = sphi 0, %s86
      %s89 = sphi 0, %s88
      %s103 = sphi 0, %s89
      %s107 = sphi 0, %s107
      %s109 = sphi 0, %s107
      %s110 = sphi 0, %s109
      %s124 = sphi 0, %s110
      %s128 = sphi 0, %s128
      %s130 = sphi 0, %s128
      %s131 = sphi 0, %s130
      %s145 = sphi 0, %s131
      %s149 = sphi 0, %s149
      %s151 = sphi 0, %s149
      %s152 = sphi 0, %s151
      %s166 = sphi 0, %s152
      %s170 = sphi 0, %s170
      %s172 = sphi 0, %s170
      %s173 = sphi 0, %s172
      %s187 = sphi 0, %s173
      %s191 = sphi 0, %s191
      %s193 = sphi 0, %s191
      %s194 = sphi 0, %s193
      %s208 = sphi 0, %s194
      %s214 = sphi 0, %s216
      %s217 = sphi 0, %s214
      %s218 = sphi 0, %s217
      %s234 = sphi 0, %s218
    $region4: #{upsampling_forward.1} parent=1 // loop_header_branch
      %29 = sbr.rel (%p27) target = $region8
    $region5: #{upsampling_forward.1} parent=1 // loop_body
      %s31 = ssub.s32 %s26, 1
      %s32 = ssub.s32 %s26, 2
      %s33 = sadd.s32 %s26, 1
      %s34 = ssub.s32 %s26, %s33
      %p35 = scmp.eq.s32.totalorder %s34, 0
      %s37 = sadd.s32 %s36, 1
      %s38 = scalar_select %p35, %s36, %s37
      %p41 = pneg %p35
      %p42 = scmp.eq.s32.totalorder %s26, 1
      %p43 = por %p41, %p42
      %p44 = scmp.ne.s32.totalorder %s36, %s39
      %p45 = scmp.eq.s32.totalorder %s26, 0
      %p46 = por %p44, %p45
      %p47 = scmp.ne.s32.totalorder %s36, %s39
      %p48 = scmp.eq.s32.totalorder %s31, 1
      %p49 = por %p47, %p48
      %p50 = scmp.ne.s32.totalorder %s39, %s40
      %p51 = scmp.eq.s32.totalorder %s31, 0
      %p52 = por %p50, %p51
      %p53 = scmp.ne.s32.totalorder %s39, %s40
      %p54 = scmp.eq.s32.totalorder %s32, 1
      %p55 = por %p53, %p54
      %p57 = scmp.ne.s32.totalorder %s40, %s56
      %p58 = scmp.eq.s32.totalorder %s32, 0
      %p59 = por %p57, %p58
      %s60 = ssub.s32 %s26, %s33
      %p61 = scmp.eq.s32.totalorder %s60, 0
      %s63 = sadd.s32 %s62, 1
      %s64 = scalar_select %p61, %s62, %s63
      %p67 = pneg %p61
      %p68 = scmp.eq.s32.totalorder %s26, 1
      %p69 = por %p67, %p68
      %p70 = scmp.ne.s32.totalorder %s62, %s65
      %p71 = scmp.eq.s32.totalorder %s26, 0
      %p72 = por %p70, %p71
      %p73 = scmp.ne.s32.totalorder %s62, %s65
      %p74 = scmp.eq.s32.totalorder %s31, 1
      %p75 = por %p73, %p74
      %p76 = scmp.ne.s32.totalorder %s65, %s66
      %p77 = scmp.eq.s32.totalorder %s31, 0
      %p78 = por %p76, %p77
      %p79 = scmp.ne.s32.totalorder %s65, %s66
      %p80 = scmp.eq.s32.totalorder %s32, 1
      %p81 = por %p79, %p80
      %p83 = scmp.ne.s32.totalorder %s66, %s82
      %p84 = scmp.eq.s32.totalorder %s32, 0
      %p85 = por %p83, %p84
      %s87 = sadd.s32 %s86, 1
      %p90 = scmp.eq.s32.totalorder %s26, 1
      %p91 = scmp.ne.s32.totalorder %s86, %s88
      %p92 = scmp.eq.s32.totalorder %s26, 0
      %p93 = por %p91, %p92
      %p94 = scmp.ne.s32.totalorder %s86, %s88
      %p95 = scmp.eq.s32.totalorder %s31, 1
      %p96 = por %p94, %p95
      %p97 = scmp.ne.s32.totalorder %s88, %s89
      %p98 = scmp.eq.s32.totalorder %s31, 0
      %p99 = por %p97, %p98
      %p100 = scmp.ne.s32.totalorder %s88, %s89
      %p101 = scmp.eq.s32.totalorder %s32, 1
      %p102 = por %p100, %p101
      %p104 = scmp.ne.s32.totalorder %s89, %s103
      %p105 = scmp.eq.s32.totalorder %s32, 0
      %p106 = por %p104, %p105
      %s108 = sadd.s32 %s107, 1
      %p111 = scmp.eq.s32.totalorder %s26, 1
      %p112 = scmp.ne.s32.totalorder %s107, %s109
      %p113 = scmp.eq.s32.totalorder %s26, 0
      %p114 = por %p112, %p113
      %p115 = scmp.ne.s32.totalorder %s107, %s109
      %p116 = scmp.eq.s32.totalorder %s31, 1
      %p117 = por %p115, %p116
      %p118 = scmp.ne.s32.totalorder %s109, %s110
      %p119 = scmp.eq.s32.totalorder %s31, 0
      %p120 = por %p118, %p119
      %p121 = scmp.ne.s32.totalorder %s109, %s110
      %p122 = scmp.eq.s32.totalorder %s32, 1
      %p123 = por %p121, %p122
      %p125 = scmp.ne.s32.totalorder %s110, %s124
      %p126 = scmp.eq.s32.totalorder %s32, 0
      %p127 = por %p125, %p126
      %s129 = sadd.s32 %s128, 1
      %p132 = scmp.eq.s32.totalorder %s26, 1
      %p133 = scmp.ne.s32.totalorder %s128, %s130
      %p134 = scmp.eq.s32.totalorder %s26, 0
      %p135 = por %p133, %p134
      %p136 = scmp.ne.s32.totalorder %s128, %s130
      %p137 = scmp.eq.s32.totalorder %s31, 1
      %p138 = por %p136, %p137
      %p139 = scmp.ne.s32.totalorder %s130, %s131
      %p140 = scmp.eq.s32.totalorder %s31, 0
      %p141 = por %p139, %p140
      %p142 = scmp.ne.s32.totalorder %s130, %s131
      %p143 = scmp.eq.s32.totalorder %s32, 1
      %p144 = por %p142, %p143
      %p146 = scmp.ne.s32.totalorder %s131, %s145
      %p147 = scmp.eq.s32.totalorder %s32, 0
      %p148 = por %p146, %p147
      %s150 = sadd.s32 %s149, 1
      %p153 = scmp.eq.s32.totalorder %s26, 1
      %p154 = scmp.ne.s32.totalorder %s149, %s151
      %p155 = scmp.eq.s32.totalorder %s26, 0
      %p156 = por %p154, %p155
      %p157 = scmp.ne.s32.totalorder %s149, %s151
      %p158 = scmp.eq.s32.totalorder %s31, 1
      %p159 = por %p157, %p158
      %p160 = scmp.ne.s32.totalorder %s151, %s152
      %p161 = scmp.eq.s32.totalorder %s31, 0
      %p162 = por %p160, %p161
      %p163 = scmp.ne.s32.totalorder %s151, %s152
      %p164 = scmp.eq.s32.totalorder %s32, 1
      %p165 = por %p163, %p164
      %p167 = scmp.ne.s32.totalorder %s152, %s166
      %p168 = scmp.eq.s32.totalorder %s32, 0
      %p169 = por %p167, %p168
      %s171 = sadd.s32 %s170, 1
      %p174 = scmp.eq.s32.totalorder %s26, 1
      %p175 = scmp.ne.s32.totalorder %s170, %s172
      %p176 = scmp.eq.s32.totalorder %s26, 0
      %p177 = por %p175, %p176
      %p178 = scmp.ne.s32.totalorder %s170, %s172
      %p179 = scmp.eq.s32.totalorder %s31, 1
      %p180 = por %p178, %p179
      %p181 = scmp.ne.s32.totalorder %s172, %s173
      %p182 = scmp.eq.s32.totalorder %s31, 0
      %p183 = por %p181, %p182
      %p184 = scmp.ne.s32.totalorder %s172, %s173
      %p185 = scmp.eq.s32.totalorder %s32, 1
      %p186 = por %p184, %p185
      %p188 = scmp.ne.s32.totalorder %s173, %s187
      %p189 = scmp.eq.s32.totalorder %s32, 0
      %p190 = por %p188, %p189
      %s192 = sadd.s32 %s191, 1
      %p195 = scmp.eq.s32.totalorder %s26, 1
      %p196 = scmp.ne.s32.totalorder %s191, %s193
      %p197 = scmp.eq.s32.totalorder %s26, 0
      %p198 = por %p196, %p197
      %p199 = scmp.ne.s32.totalorder %s191, %s193
      %p200 = scmp.eq.s32.totalorder %s31, 1
      %p201 = por %p199, %p200
      %p202 = scmp.ne.s32.totalorder %s193, %s194
      %p203 = scmp.eq.s32.totalorder %s31, 0
      %p204 = por %p202, %p203
      %p205 = scmp.ne.s32.totalorder %s193, %s194
      %p206 = scmp.eq.s32.totalorder %s32, 1
      %p207 = por %p205, %p206
      %p209 = scmp.ne.s32.totalorder %s194, %s208
      %p210 = scmp.eq.s32.totalorder %s32, 0
      %p211 = por %p209, %p210
      %s212 = ssub.s32 %s26, %s33
      %p213 = scmp.eq.s32.totalorder %s212, 0
      %s215 = sadd.s32 %s214, 1
      %s216 = scalar_select %p213, %s214, %s215
      %p219 = pneg %p213
      %p220 = scmp.eq.s32.totalorder %s26, 1
      %p221 = por %p219, %p220
      %p222 = scmp.ne.s32.totalorder %s214, %s217
      %p223 = scmp.eq.s32.totalorder %s26, 0
      %p224 = por %p222, %p223
      %p225 = scmp.ne.s32.totalorder %s214, %s217
      %p226 = scmp.eq.s32.totalorder %s31, 1
      %p227 = por %p225, %p226
      %p228 = scmp.ne.s32.totalorder %s217, %s218
      %p229 = scmp.eq.s32.totalorder %s31, 0
      %p230 = por %p228, %p229
      %p231 = scmp.ne.s32.totalorder %s217, %s218
      %p232 = scmp.eq.s32.totalorder %s32, 1
      %p233 = por %p231, %p232
      %p235 = scmp.ne.s32.totalorder %s218, %s234
      %p236 = scmp.eq.s32.totalorder %s32, 0
      %p237 = por %p235, %p236
      %p238 = scmp.le.s32.totalorder 1, %s26
      %p239 = scmp.lt.s32.totalorder %s26, 3
      %p240 = pnand %p238, %p239
      %p241 = pneg %p240
      // Predicated region
      $region9: #{upsampling_forward.1} parent=5 // pred_check
        _
      $region10: #{upsampling_forward.1} parent=5 // pred_check_branch
        %243 = sbr.rel (%p240) target = $region12
      $region11: #{upsampling_forward.1} parent=5 // pred_region
        %s244 = ssub.s32 %s26, 1
        // Predicated region
        $region13: #{upsampling_forward.1} parent=11 // pred_check
          %p245 = pneg %p99
        $region14: #{upsampling_forward.1} parent=11 // pred_check_branch
          %247 = sbr.rel (%p245) target = $region16
        $region15: #{upsampling_forward.1} parent=11 // pred_region
          %s249 = ssub.s32 576, 576
          %250 = vsyncadd [#allocation6], %s249
          %s251 = sshll.u32 [#allocation7], 4
          %s252 = int_to_ptr.vmem [resolvable:$true] %s251
          %257 = dma.hbm_to_vmem [thread:$0]  %s2, 576, %s252, [#allocation6], 64, 64, 4
        $region16: #{upsampling_forward.1} parent=11 // pred_fallthru
          _
        // Predicated region
        $region17: #{upsampling_forward.1} parent=11 // pred_check
          %p258 = pneg %p120
        $region18: #{upsampling_forward.1} parent=11 // pred_check_branch
          %260 = sbr.rel (%p258) target = $region20
        $region19: #{upsampling_forward.1} parent=11 // pred_region
          %s262 = ssub.s32 16, 16
          %263 = vsyncadd [#allocation9], %s262
          %s265 = sshll.u32 [#allocation8], 4
          %s266 = int_to_ptr.vmem [resolvable:$true] %s265
          %268 = dma.hbm_to_vmem [thread:$0]  %s3, 16, %s266, [#allocation9]
        $region20: #{upsampling_forward.1} parent=11 // pred_fallthru
          _
        // Predicated region
        $region21: #{upsampling_forward.1} parent=11 // pred_check
          %p269 = pneg %p141
        $region22: #{upsampling_forward.1} parent=11 // pred_check_branch
          %271 = sbr.rel (%p269) target = $region24
        $region23: #{upsampling_forward.1} parent=11 // pred_region
          %s273 = ssub.s32 16, 16
          %274 = vsyncadd [#allocation9], %s273
          %s276 = sshll.u32 [#allocation10], 4
          %s277 = int_to_ptr.vmem [resolvable:$true] %s276
          %279 = dma.hbm_to_vmem [thread:$0]  %s4, 16, %s277, [#allocation9]
        $region24: #{upsampling_forward.1} parent=11 // pred_fallthru
          _
        // Predicated region
        $region25: #{upsampling_forward.1} parent=11 // pred_check
          %p280 = pneg %p162
        $region26: #{upsampling_forward.1} parent=11 // pred_check_branch
          %282 = sbr.rel (%p280) target = $region28
        $region27: #{upsampling_forward.1} parent=11 // pred_region
          %s284 = ssub.s32 320, 320
          %285 = vsyncadd [#allocation12], %s284
          %s286 = sshll.u32 [#allocation11], 4
          %s287 = int_to_ptr.vmem [resolvable:$true] %s286
          %292 = dma.hbm_to_vmem [thread:$0]  %s5, 320, %s287, [#allocation12], 64, 64, 4
        $region28: #{upsampling_forward.1} parent=11 // pred_fallthru
          _
        // Predicated region
        $region29: #{upsampling_forward.1} parent=11 // pred_check
          %p293 = pneg %p183
        $region30: #{upsampling_forward.1} parent=11 // pred_check_branch
          %295 = sbr.rel (%p293) target = $region32
        $region31: #{upsampling_forward.1} parent=11 // pred_region
          %s297 = ssub.s32 16, 16
          %298 = vsyncadd [#allocation12], %s297
          %s300 = sshll.u32 [#allocation13], 4
          %s301 = int_to_ptr.vmem [resolvable:$true] %s300
          %303 = dma.hbm_to_vmem [thread:$0]  %s6, 16, %s301, [#allocation12]
        $region32: #{upsampling_forward.1} parent=11 // pred_fallthru
          _
        // Predicated region
        $region33: #{upsampling_forward.1} parent=11 // pred_check
          %p304 = pneg %p204
        $region34: #{upsampling_forward.1} parent=11 // pred_check_branch
          %306 = sbr.rel (%p304) target = $region36
        $region35: #{upsampling_forward.1} parent=11 // pred_region
          %s308 = ssub.s32 16, 16
          %309 = vsyncadd [#allocation15], %s308
          %s311 = sshll.u32 [#allocation14], 4
          %s312 = int_to_ptr.vmem [resolvable:$true] %s311
          %314 = dma.hbm_to_vmem [thread:$0]  %s7, 16, %s312, [#allocation15]
        $region36: #{upsampling_forward.1} parent=11 // pred_fallthru
          _
      $region12: #{upsampling_forward.1} parent=5 // pred_fallthru
        _
      %p315 = scmp.lt.s32.totalorder %s26, 2
      // Predicated region
      $region37: #{upsampling_forward.1} parent=5 // pred_check
        %p316 = pneg %p315
      $region38: #{upsampling_forward.1} parent=5 // pred_check_branch
        %318 = sbr.rel (%p316) target = $region40
      $region39: #{upsampling_forward.1} parent=5 // pred_region
        // Predicated region
        $region41: #{upsampling_forward.1} parent=39 // pred_check
          %p319 = pneg %p46
        $region42: #{upsampling_forward.1} parent=39 // pred_check_branch
          %321 = sbr.rel (%p319) target = $region44
        $region43: #{upsampling_forward.1} parent=39 // pred_region
          %s322 = sand.u32 %s36, 1
          %s323 = scalar_lea.sflag [#allocation3], %s322
          %s324 = sand.u32 %s36, 1
          %s325 = smul.addr %s324, 128
          %s326 = scalar_lea.vmem [#allocation2], %s325
          %s328 = ssub.s32 2048, 2048
          %329 = vsyncadd %s323, %s328
          %s330 = smul.addr %s26, 32
          %s331 = smul.addr %s330, 64
          %s332 = scalar_lea.hbm %s0, %s331
          %s333 = sshll.u32 %s326, 4
          %s334 = int_to_ptr.vmem [resolvable:$true] %s333
          %339 = dma.hbm_to_vmem [thread:$0]  %s332, 2048, %s334, %s323, 64, 64, 4
        $region44: #{upsampling_forward.1} parent=39 // pred_fallthru
          _
        // Predicated region
        $region45: #{upsampling_forward.1} parent=39 // pred_check
          %p340 = pneg %p72
        $region46: #{upsampling_forward.1} parent=39 // pred_check_branch
          %342 = sbr.rel (%p340) target = $region48
        $region47: #{upsampling_forward.1} parent=39 // pred_region
          %s343 = sand.u32 %s26, 1
          %s344 = scalar_lea.sflag [#allocation6], %s343
          %s345 = sand.u32 %s62, 1
          %s346 = smul.addr %s345, 128
          %s347 = scalar_lea.vmem [#allocation5], %s346
          %s349 = ssub.s32 2048, 2048
          %350 = vsyncadd %s344, %s349
          %s351 = smul.addr %s26, 32
          %s352 = smul.addr %s351, 64
          %s353 = scalar_lea.hbm %s1, %s352
          %s354 = sshll.u32 %s347, 4
          %s355 = int_to_ptr.vmem [resolvable:$true] %s354
          %360 = dma.hbm_to_vmem [thread:$0]  %s353, 2048, %s355, %s344, 64, 64, 4
        $region48: #{upsampling_forward.1} parent=39 // pred_fallthru
          _
      $region40: #{upsampling_forward.1} parent=5 // pred_fallthru
        _
      %p361 = scmp.le.s32.totalorder 1, %s26
      %p362 = scmp.lt.s32.totalorder %s26, 3
      %p363 = pnand %p361, %p362
      %p364 = pneg %p363
      // Predicated region
      $region49: #{upsampling_forward.1} parent=5 // pred_check
        _
      $region50: #{upsampling_forward.1} parent=5 // pred_check_branch
        %366 = sbr.rel (%p363) target = $region52
      $region51: #{upsampling_forward.1} parent=5 // pred_region
        %s367 = ssub.s32 %s26, 1
        %s368 = sand.u32 %s39, 1
        %s369 = scalar_lea.sflag [#allocation3], %s368
        %s370 = sand.u32 %s39, 1
        %s371 = smul.addr %s370, 128
        %s372 = scalar_lea.vmem [#allocation2], %s371
        // Predicated region
        $region53: #{upsampling_forward.1} parent=51 // pred_check
          %p373 = pneg %p52
        $region54: #{upsampling_forward.1} parent=51 // pred_check_branch
          %375 = sbr.rel (%p373) target = $region56
        $region55: #{upsampling_forward.1} parent=51 // pred_region
          %376 = dma.done %s369, 2048
        $region56: #{upsampling_forward.1} parent=51 // pred_fallthru
          _
        %s377 = sand.u32 %s31, 1
        %s378 = scalar_lea.sflag [#allocation6], %s377
        %s379 = sand.u32 %s65, 1
        %s380 = smul.addr %s379, 128
        %s381 = scalar_lea.vmem [#allocation5], %s380
        // Predicated region
        $region57: #{upsampling_forward.1} parent=51 // pred_check
          %p382 = pneg %p78
        $region58: #{upsampling_forward.1} parent=51 // pred_check_branch
          %384 = sbr.rel (%p382) target = $region60
        $region59: #{upsampling_forward.1} parent=51 // pred_region
          %385 = dma.done %s378, 2048
        $region60: #{upsampling_forward.1} parent=51 // pred_fallthru
          _
        // Predicated region
        $region61: #{upsampling_forward.1} parent=51 // pred_check
          %p386 = pneg %p99
        $region62: #{upsampling_forward.1} parent=51 // pred_check_branch
          %388 = sbr.rel (%p386) target = $region64
        $region63: #{upsampling_forward.1} parent=51 // pred_region
          %389 = dma.done [#allocation6], 576
        $region64: #{upsampling_forward.1} parent=51 // pred_fallthru
          _
        // Predicated region
        $region65: #{upsampling_forward.1} parent=51 // pred_check
          %p390 = pneg %p120
        $region66: #{upsampling_forward.1} parent=51 // pred_check_branch
          %392 = sbr.rel (%p390) target = $region68
        $region67: #{upsampling_forward.1} parent=51 // pred_region
          %393 = dma.done [#allocation9], 16
        $region68: #{upsampling_forward.1} parent=51 // pred_fallthru
          _
        // Predicated region
        $region69: #{upsampling_forward.1} parent=51 // pred_check
          %p394 = pneg %p141
        $region70: #{upsampling_forward.1} parent=51 // pred_check_branch
          %396 = sbr.rel (%p394) target = $region72
        $region71: #{upsampling_forward.1} parent=51 // pred_region
          %397 = dma.done [#allocation9], 16
        $region72: #{upsampling_forward.1} parent=51 // pred_fallthru
          _
        // Predicated region
        $region73: #{upsampling_forward.1} parent=51 // pred_check
          %p398 = pneg %p162
        $region74: #{upsampling_forward.1} parent=51 // pred_check_branch
          %400 = sbr.rel (%p398) target = $region76
        $region75: #{upsampling_forward.1} parent=51 // pred_region
          %401 = dma.done [#allocation12], 320
        $region76: #{upsampling_forward.1} parent=51 // pred_fallthru
          _
        // Predicated region
        $region77: #{upsampling_forward.1} parent=51 // pred_check
          %p402 = pneg %p183
        $region78: #{upsampling_forward.1} parent=51 // pred_check_branch
          %404 = sbr.rel (%p402) target = $region80
        $region79: #{upsampling_forward.1} parent=51 // pred_region
          %405 = dma.done [#allocation12], 16
        $region80: #{upsampling_forward.1} parent=51 // pred_fallthru
          _
        // Predicated region
        $region81: #{upsampling_forward.1} parent=51 // pred_check
          %p406 = pneg %p204
        $region82: #{upsampling_forward.1} parent=51 // pred_check_branch
          %408 = sbr.rel (%p406) target = $region84
        $region83: #{upsampling_forward.1} parent=51 // pred_region
          %409 = dma.done [#allocation15], 16
        $region84: #{upsampling_forward.1} parent=51 // pred_fallthru
          _
        %s410 = sand.u32 %s39, 1
        %s411 = scalar_lea.sflag [#allocation3], %s410
        %s412 = sand.u32 %s39, 1
        %s413 = smul.addr %s412, 128
        %s414 = scalar_lea.vmem [#allocation2], %s413
        %p415 = pneg %p52
        %p416 = pneg %p49
        %s417 = sand.u32 %s31, 1
        %s418 = scalar_lea.sflag [#allocation6], %s417
        %s419 = sand.u32 %s65, 1
        %s420 = smul.addr %s419, 128
        %s421 = scalar_lea.vmem [#allocation5], %s420
        %p422 = pneg %p78
        %p423 = pneg %p75
        %p424 = pneg %p99
        %p425 = pneg %p96
        %p426 = pneg %p120
        %p427 = pneg %p117
        %p428 = pneg %p141
        %p429 = pneg %p138
        %p430 = pneg %p162
        %p431 = pneg %p159
        %p432 = pneg %p183
        %p433 = pneg %p180
        %p434 = pneg %p204
        %p435 = pneg %p201
        %p436 = pneg %p230
        %p437 = pneg %p227
        %s438 = sand.u32 %s217, 1
        %s439 = scalar_lea.sflag [#allocation4], %s438
        %s440 = sand.u32 %s217, 1
        %s441 = smul.addr %s440, 8
        %s442 = scalar_lea.vmem [#allocation16], %s441
        %v444 = vld [vmem:[%s372] sm:$0xf]
        %v445 = vld [vmem:[%s372 + $0x4] sm:$0xf]
        %v446 = vld [vmem:[%s372 + $0x8] sm:$0xf]
        %v447 = vld [vmem:[%s372 + $0xc] sm:$0xf]
        %v448 = vld [vmem:[%s372 + $0x10] sm:$0xf]
        %v449 = vld [vmem:[%s372 + $0x14] sm:$0xf]
        %v450 = vld [vmem:[%s372 + $0x18] sm:$0xf]
        %v451 = vld [vmem:[%s372 + $0x1c] sm:$0xf]
        %v452 = vld [vmem:[%s372 + $0x20] sm:$0xf]
        %v453 = vld [vmem:[%s372 + $0x24] sm:$0xf]
        %v454 = vld [vmem:[%s372 + $0x28] sm:$0xf]
        %v455 = vld [vmem:[%s372 + $0x2c] sm:$0xf]
        %v456 = vld [vmem:[%s372 + $0x30] sm:$0xf]
        %v457 = vld [vmem:[%s372 + $0x34] sm:$0xf]
        %v458 = vld [vmem:[%s372 + $0x38] sm:$0xf]
        %v459 = vld [vmem:[%s372 + $0x3c] sm:$0xf]
        %v460 = vld [vmem:[%s372 + $0x40] sm:$0xf]
        %v461 = vld [vmem:[%s372 + $0x44] sm:$0xf]
        %v462 = vld [vmem:[%s372 + $0x48] sm:$0xf]
        %v463 = vld [vmem:[%s372 + $0x4c] sm:$0xf]
        %v464 = vld [vmem:[%s372 + $0x50] sm:$0xf]
        %v465 = vld [vmem:[%s372 + $0x54] sm:$0xf]
        %v466 = vld [vmem:[%s372 + $0x58] sm:$0xf]
        %v467 = vld [vmem:[%s372 + $0x5c] sm:$0xf]
        %v468 = vld [vmem:[%s372 + $0x60] sm:$0xf]
        %v469 = vld [vmem:[%s372 + $0x64] sm:$0xf]
        %v470 = vld [vmem:[%s372 + $0x68] sm:$0xf]
        %v471 = vld [vmem:[%s372 + $0x6c] sm:$0xf]
        %v472 = vld [vmem:[%s372 + $0x70] sm:$0xf]
        %v473 = vld [vmem:[%s372 + $0x74] sm:$0xf]
        %v474 = vld [vmem:[%s372 + $0x78] sm:$0xf]
        %v475 = vld [vmem:[%s372 + $0x7c] sm:$0xf]
        %v476 = vld [vmem:[%s381] sm:$0xf]
        %v477 = vld [vmem:[%s381 + $0x4] sm:$0xf]
        %v478 = vld [vmem:[%s381 + $0x8] sm:$0xf]
        %v479 = vld [vmem:[%s381 + $0xc] sm:$0xf]
        %v480 = vld [vmem:[%s381 + $0x10] sm:$0xf]
        %v481 = vld [vmem:[%s381 + $0x14] sm:$0xf]
        %v482 = vld [vmem:[%s381 + $0x18] sm:$0xf]
        %v483 = vld [vmem:[%s381 + $0x1c] sm:$0xf]
        %v484 = vld [vmem:[%s381 + $0x20] sm:$0xf]
        %v485 = vld [vmem:[%s381 + $0x24] sm:$0xf]
        %v486 = vld [vmem:[%s381 + $0x28] sm:$0xf]
        %v487 = vld [vmem:[%s381 + $0x2c] sm:$0xf]
        %v488 = vld [vmem:[%s381 + $0x30] sm:$0xf]
        %v489 = vld [vmem:[%s381 + $0x34] sm:$0xf]
        %v490 = vld [vmem:[%s381 + $0x38] sm:$0xf]
        %v491 = vld [vmem:[%s381 + $0x3c] sm:$0xf]
        %v492 = vld [vmem:[%s381 + $0x40] sm:$0xf]
        %v493 = vld [vmem:[%s381 + $0x44] sm:$0xf]
        %v494 = vld [vmem:[%s381 + $0x48] sm:$0xf]
        %v495 = vld [vmem:[%s381 + $0x4c] sm:$0xf]
        %v496 = vld [vmem:[%s381 + $0x50] sm:$0xf]
        %v497 = vld [vmem:[%s381 + $0x54] sm:$0xf]
        %v498 = vld [vmem:[%s381 + $0x58] sm:$0xf]
        %v499 = vld [vmem:[%s381 + $0x5c] sm:$0xf]
        %v500 = vld [vmem:[%s381 + $0x60] sm:$0xf]
        %v501 = vld [vmem:[%s381 + $0x64] sm:$0xf]
        %v502 = vld [vmem:[%s381 + $0x68] sm:$0xf]
        %v503 = vld [vmem:[%s381 + $0x6c] sm:$0xf]
        %v504 = vld [vmem:[%s381 + $0x70] sm:$0xf]
        %v505 = vld [vmem:[%s381 + $0x74] sm:$0xf]
        %v506 = vld [vmem:[%s381 + $0x78] sm:$0xf]
        %v507 = vld [vmem:[%s381 + $0x7c] sm:$0xf]
        %v540 = vunpack.c.l.b16 %v444
        %v541 = vunpack.c.l.b16 %v445
        %v542 = vunpack.c.l.b16 %v446
        %v543 = vunpack.c.l.b16 %v447
        %v544 = vunpack.c.l.b16 %v448
        %v545 = vunpack.c.l.b16 %v449
        %v546 = vunpack.c.l.b16 %v450
        %v547 = vunpack.c.l.b16 %v451
        %v548 = vunpack.c.l.b16 %v452
        %v549 = vunpack.c.l.b16 %v453
        %v550 = vunpack.c.l.b16 %v454
        %v551 = vunpack.c.l.b16 %v455
        %v552 = vunpack.c.l.b16 %v456
        %v553 = vunpack.c.l.b16 %v457
        %v554 = vunpack.c.l.b16 %v458
        %v555 = vunpack.c.l.b16 %v459
        %v556 = vunpack.c.l.b16 %v460
        %v557 = vunpack.c.l.b16 %v461
        %v558 = vunpack.c.l.b16 %v462
        %v559 = vunpack.c.l.b16 %v463
        %v560 = vunpack.c.l.b16 %v464
        %v561 = vunpack.c.l.b16 %v465
        %v562 = vunpack.c.l.b16 %v466
        %v563 = vunpack.c.l.b16 %v467
        %v564 = vunpack.c.l.b16 %v468
        %v565 = vunpack.c.l.b16 %v469
        %v566 = vunpack.c.l.b16 %v470
        %v567 = vunpack.c.l.b16 %v471
        %v568 = vunpack.c.l.b16 %v472
        %v569 = vunpack.c.l.b16 %v473
        %v570 = vunpack.c.l.b16 %v474
        %v571 = vunpack.c.l.b16 %v475
        %v572 = vpack.c.b16 %v541, %v540
        %v573 = vpack.c.b16 %v543, %v542
        %v574 = vpack.c.b16 %v545, %v544
        %v575 = vpack.c.b16 %v547, %v546
        %v576 = vpack.c.b16 %v549, %v548
        %v577 = vpack.c.b16 %v551, %v550
        %v578 = vpack.c.b16 %v553, %v552
        %v579 = vpack.c.b16 %v555, %v554
        %v580 = vpack.c.b16 %v557, %v556
        %v581 = vpack.c.b16 %v559, %v558
        %v582 = vpack.c.b16 %v561, %v560
        %v583 = vpack.c.b16 %v563, %v562
        %v584 = vpack.c.b16 %v565, %v564
        %v585 = vpack.c.b16 %v567, %v566
        %v586 = vpack.c.b16 %v569, %v568
        %v587 = vpack.c.b16 %v571, %v570
        %v620 = vunpack.c.l.b16 %v476
        %v621 = vunpack.c.l.b16 %v477
        %v622 = vunpack.c.l.b16 %v478
        %v623 = vunpack.c.l.b16 %v479
        %v624 = vunpack.c.l.b16 %v480
        %v625 = vunpack.c.l.b16 %v481
        %v626 = vunpack.c.l.b16 %v482
        %v627 = vunpack.c.l.b16 %v483
        %v628 = vunpack.c.l.b16 %v484
        %v629 = vunpack.c.l.b16 %v485
        %v630 = vunpack.c.l.b16 %v486
        %v631 = vunpack.c.l.b16 %v487
        %v632 = vunpack.c.l.b16 %v488
        %v633 = vunpack.c.l.b16 %v489
        %v634 = vunpack.c.l.b16 %v490
        %v635 = vunpack.c.l.b16 %v491
        %v636 = vunpack.c.l.b16 %v492
        %v637 = vunpack.c.l.b16 %v493
        %v638 = vunpack.c.l.b16 %v494
        %v639 = vunpack.c.l.b16 %v495
        %v640 = vunpack.c.l.b16 %v496
        %v641 = vunpack.c.l.b16 %v497
        %v642 = vunpack.c.l.b16 %v498
        %v643 = vunpack.c.l.b16 %v499
        %v644 = vunpack.c.l.b16 %v500
        %v645 = vunpack.c.l.b16 %v501
        %v646 = vunpack.c.l.b16 %v502
        %v647 = vunpack.c.l.b16 %v503
        %v648 = vunpack.c.l.b16 %v504
        %v649 = vunpack.c.l.b16 %v505
        %v650 = vunpack.c.l.b16 %v506
        %v651 = vunpack.c.l.b16 %v507
        %v652 = vpack.c.b16 %v621, %v620
        %v653 = vpack.c.b16 %v623, %v622
        %v654 = vpack.c.b16 %v625, %v624
        %v655 = vpack.c.b16 %v627, %v626
        %v656 = vpack.c.b16 %v629, %v628
        %v657 = vpack.c.b16 %v631, %v630
        %v658 = vpack.c.b16 %v633, %v632
        %v659 = vpack.c.b16 %v635, %v634
        %v660 = vpack.c.b16 %v637, %v636
        %v661 = vpack.c.b16 %v639, %v638
        %v662 = vpack.c.b16 %v641, %v640
        %v663 = vpack.c.b16 %v643, %v642
        %v664 = vpack.c.b16 %v645, %v644
        %v665 = vpack.c.b16 %v647, %v646
        %v666 = vpack.c.b16 %v649, %v648
        %v667 = vpack.c.b16 %v651, %v650
        %668 = vrot.lane.b32.xlu0 %v652, 4
        %v669 = vpop.permute.xlu0 %668
        %670 = vrot.lane.b32.xlu0 %v653, 4
        %v671 = vpop.permute.xlu0 %670
        %672 = vrot.lane.b32.xlu0 %v654, 4
        %v673 = vpop.permute.xlu0 %672
        %674 = vrot.lane.b32.xlu0 %v655, 4
        %v675 = vpop.permute.xlu0 %674
        %676 = vrot.lane.b32.xlu0 %v656, 4
        %v677 = vpop.permute.xlu0 %676
        %678 = vrot.lane.b32.xlu0 %v657, 4
        %v679 = vpop.permute.xlu0 %678
        %680 = vrot.lane.b32.xlu0 %v658, 4
        %v681 = vpop.permute.xlu0 %680
        %682 = vrot.lane.b32.xlu0 %v659, 4
        %v683 = vpop.permute.xlu0 %682
        %684 = vrot.lane.b32.xlu0 %v660, 4
        %v685 = vpop.permute.xlu0 %684
        %686 = vrot.lane.b32.xlu0 %v661, 4
        %v687 = vpop.permute.xlu0 %686
        %688 = vrot.lane.b32.xlu0 %v662, 4
        %v689 = vpop.permute.xlu0 %688
        %690 = vrot.lane.b32.xlu0 %v663, 4
        %v691 = vpop.permute.xlu0 %690
        %692 = vrot.lane.b32.xlu0 %v664, 4
        %v693 = vpop.permute.xlu0 %692
        %694 = vrot.lane.b32.xlu0 %v665, 4
        %v695 = vpop.permute.xlu0 %694
        %696 = vrot.lane.b32.xlu0 %v666, 4
        %v697 = vpop.permute.xlu0 %696
        %698 = vrot.lane.b32.xlu0 %v667, 4
        %v699 = vpop.permute.xlu0 %698
        %vm700 = vcmask 31744
        %v703 = vsel %vm700, %v572, %v669
        %v706 = vsel %vm700, %v573, %v671
        %v709 = vsel %vm700, %v574, %v673
        %v712 = vsel %vm700, %v575, %v675
        %v715 = vsel %vm700, %v576, %v677
        %v718 = vsel %vm700, %v577, %v679
        %v721 = vsel %vm700, %v578, %v681
        %v724 = vsel %vm700, %v579, %v683
        %v727 = vsel %vm700, %v580, %v685
        %v730 = vsel %vm700, %v581, %v687
        %v733 = vsel %vm700, %v582, %v689
        %v736 = vsel %vm700, %v583, %v691
        %v739 = vsel %vm700, %v584, %v693
        %v742 = vsel %vm700, %v585, %v695
        %v745 = vsel %vm700, %v586, %v697
        %v748 = vsel %vm700, %v587, %v699
        %765 = vrot.lane.b32.xlu0 %v703, 8
        %v766 = vpop.permute.xlu0 %765
        %767 = vrot.lane.b32.xlu0 %v706, 8
        %v768 = vpop.permute.xlu0 %767
        %769 = vrot.lane.b32.xlu0 %v709, 8
        %v770 = vpop.permute.xlu0 %769
        %771 = vrot.lane.b32.xlu0 %v712, 8
        %v772 = vpop.permute.xlu0 %771
        %773 = vrot.lane.b32.xlu0 %v715, 8
        %v774 = vpop.permute.xlu0 %773
        %775 = vrot.lane.b32.xlu0 %v718, 8
        %v776 = vpop.permute.xlu0 %775
        %777 = vrot.lane.b32.xlu0 %v721, 8
        %v778 = vpop.permute.xlu0 %777
        %779 = vrot.lane.b32.xlu0 %v724, 8
        %v780 = vpop.permute.xlu0 %779
        %781 = vrot.lane.b32.xlu0 %v727, 8
        %v782 = vpop.permute.xlu0 %781
        %783 = vrot.lane.b32.xlu0 %v730, 8
        %v784 = vpop.permute.xlu0 %783
        %785 = vrot.lane.b32.xlu0 %v733, 8
        %v786 = vpop.permute.xlu0 %785
        %787 = vrot.lane.b32.xlu0 %v736, 8
        %v788 = vpop.permute.xlu0 %787
        %789 = vrot.lane.b32.xlu0 %v739, 8
        %v790 = vpop.permute.xlu0 %789
        %791 = vrot.lane.b32.xlu0 %v742, 8
        %v792 = vpop.permute.xlu0 %791
        %793 = vrot.lane.b32.xlu0 %v745, 8
        %v794 = vpop.permute.xlu0 %793
        %795 = vrot.lane.b32.xlu0 %v748, 8
        %v796 = vpop.permute.xlu0 %795
        %798 = vrot.lane.b32.xlu0 %v706, 16
        %v799 = vpop.permute.xlu0 %798
        %800 = vrot.lane.b32.xlu0 %v709, 16
        %v801 = vpop.permute.xlu0 %800
        %802 = vrot.lane.b32.xlu0 %v712, 16
        %v803 = vpop.permute.xlu0 %802
        %804 = vrot.lane.b32.xlu0 %v715, 16
        %v805 = vpop.permute.xlu0 %804
        %806 = vrot.lane.b32.xlu0 %v718, 16
        %v807 = vpop.permute.xlu0 %806
        %808 = vrot.lane.b32.xlu0 %v721, 16
        %v809 = vpop.permute.xlu0 %808
        %810 = vrot.lane.b32.xlu0 %v724, 16
        %v811 = vpop.permute.xlu0 %810
        %812 = vrot.lane.b32.xlu0 %v727, 16
        %v813 = vpop.permute.xlu0 %812
        %814 = vrot.lane.b32.xlu0 %v730, 16
        %v815 = vpop.permute.xlu0 %814
        %816 = vrot.lane.b32.xlu0 %v733, 16
        %v817 = vpop.permute.xlu0 %816
        %818 = vrot.lane.b32.xlu0 %v736, 16
        %v819 = vpop.permute.xlu0 %818
        %820 = vrot.lane.b32.xlu0 %v739, 16
        %v821 = vpop.permute.xlu0 %820
        %822 = vrot.lane.b32.xlu0 %v742, 16
        %v823 = vpop.permute.xlu0 %822
        %824 = vrot.lane.b32.xlu0 %v745, 16
        %v825 = vpop.permute.xlu0 %824
        %826 = vrot.lane.b32.xlu0 %v748, 16
        %v827 = vpop.permute.xlu0 %826
        %828 = vrot.lane.b32.xlu0 0, 16
        %v829 = vpop.permute.xlu0 %828
        %vm830 = vcmask 64512
        %v833 = vsel %vm830, 0, %v766
        %v835 = vsel %vm830, %v703, %v768
        %v837 = vsel %vm830, %v706, %v770
        %v839 = vsel %vm830, %v709, %v772
        %v841 = vsel %vm830, %v712, %v774
        %v843 = vsel %vm830, %v715, %v776
        %v845 = vsel %vm830, %v718, %v778
        %v847 = vsel %vm830, %v721, %v780
        %v849 = vsel %vm830, %v724, %v782
        %v851 = vsel %vm830, %v727, %v784
        %v853 = vsel %vm830, %v730, %v786
        %v855 = vsel %vm830, %v733, %v788
        %v857 = vsel %vm830, %v736, %v790
        %v859 = vsel %vm830, %v739, %v792
        %v861 = vsel %vm830, %v742, %v794
        %v863 = vsel %vm830, %v745, %v796
        %vm864 = vcmask 130048
        %v866 = vsel %vm864, %v833, %v799
        %v868 = vsel %vm864, %v835, %v801
        %v870 = vsel %vm864, %v837, %v803
        %v872 = vsel %vm864, %v839, %v805
        %v874 = vsel %vm864, %v841, %v807
        %v876 = vsel %vm864, %v843, %v809
        %v878 = vsel %vm864, %v845, %v811
        %v880 = vsel %vm864, %v847, %v813
        %v882 = vsel %vm864, %v849, %v815
        %v884 = vsel %vm864, %v851, %v817
        %v886 = vsel %vm864, %v853, %v819
        %v888 = vsel %vm864, %v855, %v821
        %v890 = vsel %vm864, %v857, %v823
        %v892 = vsel %vm864, %v859, %v825
        %v894 = vsel %vm864, %v861, %v827
        %v896 = vsel %vm864, %v863, %v829
        %v897 = vshrl.u32 %v866, 16
        %v899 = vrot.slane %v897, 7
        %v900 = vshll.u32 %v866, 16
        %v902 = vor.u32 %v899, %v900
        %v903 = vshrl.u32 %v868, 16
        %v905 = vrot.slane %v903, 7
        %v906 = vshll.u32 %v868, 16
        %v908 = vor.u32 %v905, %v906
        %v909 = vshrl.u32 %v870, 16
        %v911 = vrot.slane %v909, 7
        %v912 = vshll.u32 %v870, 16
        %v914 = vor.u32 %v911, %v912
        %v915 = vshrl.u32 %v872, 16
        %v917 = vrot.slane %v915, 7
        %v918 = vshll.u32 %v872, 16
        %v920 = vor.u32 %v917, %v918
        %v921 = vshrl.u32 %v874, 16
        %v923 = vrot.slane %v921, 7
        %v924 = vshll.u32 %v874, 16
        %v926 = vor.u32 %v923, %v924
        %v927 = vshrl.u32 %v876, 16
        %v929 = vrot.slane %v927, 7
        %v930 = vshll.u32 %v876, 16
        %v932 = vor.u32 %v929, %v930
        %v933 = vshrl.u32 %v878, 16
        %v935 = vrot.slane %v933, 7
        %v936 = vshll.u32 %v878, 16
        %v938 = vor.u32 %v935, %v936
        %v939 = vshrl.u32 %v880, 16
        %v941 = vrot.slane %v939, 7
        %v942 = vshll.u32 %v880, 16
        %v944 = vor.u32 %v941, %v942
        %v945 = vshrl.u32 %v882, 16
        %v947 = vrot.slane %v945, 7
        %v948 = vshll.u32 %v882, 16
        %v950 = vor.u32 %v947, %v948
        %v951 = vshrl.u32 %v884, 16
        %v953 = vrot.slane %v951, 7
        %v954 = vshll.u32 %v884, 16
        %v956 = vor.u32 %v953, %v954
        %v957 = vshrl.u32 %v886, 16
        %v959 = vrot.slane %v957, 7
        %v960 = vshll.u32 %v886, 16
        %v962 = vor.u32 %v959, %v960
        %v963 = vshrl.u32 %v888, 16
        %v965 = vrot.slane %v963, 7
        %v966 = vshll.u32 %v888, 16
        %v968 = vor.u32 %v965, %v966
        %v969 = vshrl.u32 %v890, 16
        %v971 = vrot.slane %v969, 7
        %v972 = vshll.u32 %v890, 16
        %v974 = vor.u32 %v971, %v972
        %v975 = vshrl.u32 %v892, 16
        %v977 = vrot.slane %v975, 7
        %v978 = vshll.u32 %v892, 16
        %v980 = vor.u32 %v977, %v978
        %v981 = vshrl.u32 %v894, 16
        %v983 = vrot.slane %v981, 7
        %v984 = vshll.u32 %v894, 16
        %v986 = vor.u32 %v983, %v984
        %v987 = vshrl.u32 %v896, 16
        %v989 = vrot.slane %v987, 7
        %v990 = vshll.u32 %v896, 16
        %v992 = vor.u32 %v989, %v990
        %vm1009 = vcmask 1040384
        %vm1010 = vsmask.f32 256
        %vm1011 = vmand %vm1009, %vm1010
        %v1012 = vsel %vm1011, 0, %v902
        %v1013 = vsel %vm1011, 0, %v908
        %v1014 = vsel %vm1011, 0, %v914
        %v1015 = vsel %vm1011, 0, %v920
        %v1016 = vsel %vm1011, 0, %v926
        %v1017 = vsel %vm1011, 0, %v932
        %v1018 = vsel %vm1011, 0, %v938
        %v1019 = vsel %vm1011, 0, %v944
        %v1020 = vsel %vm1011, 0, %v950
        %v1021 = vsel %vm1011, 0, %v956
        %v1022 = vsel %vm1011, 0, %v962
        %v1023 = vsel %vm1011, 0, %v968
        %v1024 = vsel %vm1011, 0, %v974
        %v1025 = vsel %vm1011, 0, %v980
        %v1026 = vsel %vm1011, 0, %v986
        %v1027 = vsel %vm1011, 0, %v992
        %v1028 = vrot.slane %v900, 1
        %v1029 = vor.u32 %v897, %v1028
        %v1030 = vrot.slane %v906, 1
        %v1031 = vor.u32 %v903, %v1030
        %v1032 = vrot.slane %v912, 1
        %v1033 = vor.u32 %v909, %v1032
        %v1034 = vrot.slane %v918, 1
        %v1035 = vor.u32 %v915, %v1034
        %v1036 = vrot.slane %v924, 1
        %v1037 = vor.u32 %v921, %v1036
        %v1038 = vrot.slane %v930, 1
        %v1039 = vor.u32 %v927, %v1038
        %v1040 = vrot.slane %v936, 1
        %v1041 = vor.u32 %v933, %v1040
        %v1042 = vrot.slane %v942, 1
        %v1043 = vor.u32 %v939, %v1042
        %v1044 = vrot.slane %v948, 1
        %v1045 = vor.u32 %v945, %v1044
        %v1046 = vrot.slane %v954, 1
        %v1047 = vor.u32 %v951, %v1046
        %v1048 = vrot.slane %v960, 1
        %v1049 = vor.u32 %v957, %v1048
        %v1050 = vrot.slane %v966, 1
        %v1051 = vor.u32 %v963, %v1050
        %v1052 = vrot.slane %v972, 1
        %v1053 = vor.u32 %v969, %v1052
        %v1054 = vrot.slane %v978, 1
        %v1055 = vor.u32 %v975, %v1054
        %v1056 = vrot.slane %v984, 1
        %v1057 = vor.u32 %v981, %v1056
        %v1058 = vrot.slane %v990, 1
        %v1059 = vor.u32 %v987, %v1058
        %vm1076 = vcmask 1047552
        %vm1077 = vsmask.f32 7424
        %vm1078 = vmand %vm1076, %vm1077
        %v1079 = vsel %vm1078, %v1029, 0
        %v1080 = vsel %vm1078, %v1031, 0
        %v1081 = vsel %vm1078, %v1033, 0
        %v1082 = vsel %vm1078, %v1035, 0
        %v1083 = vsel %vm1078, %v1037, 0
        %v1084 = vsel %vm1078, %v1039, 0
        %v1085 = vsel %vm1078, %v1041, 0
        %v1086 = vsel %vm1078, %v1043, 0
        %v1087 = vsel %vm1078, %v1045, 0
        %v1088 = vsel %vm1078, %v1047, 0
        %v1089 = vsel %vm1078, %v1049, 0
        %v1090 = vsel %vm1078, %v1051, 0
        %v1091 = vsel %vm1078, %v1053, 0
        %v1092 = vsel %vm1078, %v1055, 0
        %v1093 = vsel %vm1078, %v1057, 0
        %v1094 = vsel %vm1078, %v1059, 0
        %1111 = vrot.lane.b32.xlu0 %v866, 24
        %v1112 = vpop.permute.xlu0 %1111
        %1113 = vrot.lane.b32.xlu0 %v868, 24
        %v1114 = vpop.permute.xlu0 %1113
        %1115 = vrot.lane.b32.xlu0 %v870, 24
        %v1116 = vpop.permute.xlu0 %1115
        %1117 = vrot.lane.b32.xlu0 %v872, 24
        %v1118 = vpop.permute.xlu0 %1117
        %1119 = vrot.lane.b32.xlu0 %v874, 24
        %v1120 = vpop.permute.xlu0 %1119
        %1121 = vrot.lane.b32.xlu0 %v876, 24
        %v1122 = vpop.permute.xlu0 %1121
        %1123 = vrot.lane.b32.xlu0 %v878, 24
        %v1124 = vpop.permute.xlu0 %1123
        %1125 = vrot.lane.b32.xlu0 %v880, 24
        %v1126 = vpop.permute.xlu0 %1125
        %1127 = vrot.lane.b32.xlu0 %v882, 24
        %v1128 = vpop.permute.xlu0 %1127
        %1129 = vrot.lane.b32.xlu0 %v884, 24
        %v1130 = vpop.permute.xlu0 %1129
        %1131 = vrot.lane.b32.xlu0 %v886, 24
        %v1132 = vpop.permute.xlu0 %1131
        %1133 = vrot.lane.b32.xlu0 %v888, 24
        %v1134 = vpop.permute.xlu0 %1133
        %1135 = vrot.lane.b32.xlu0 %v890, 24
        %v1136 = vpop.permute.xlu0 %1135
        %1137 = vrot.lane.b32.xlu0 %v892, 24
        %v1138 = vpop.permute.xlu0 %1137
        %1139 = vrot.lane.b32.xlu0 %v894, 24
        %v1140 = vpop.permute.xlu0 %1139
        %1141 = vrot.lane.b32.xlu0 %v896, 24
        %v1142 = vpop.permute.xlu0 %1141
        %1159 = vrot.lane.b32.xlu0 %v1079, 48
        %v1160 = vpop.permute.xlu0 %1159
        %1161 = vrot.lane.b32.xlu0 %v1080, 48
        %v1162 = vpop.permute.xlu0 %1161
        %1163 = vrot.lane.b32.xlu0 %v1081, 48
        %v1164 = vpop.permute.xlu0 %1163
        %1165 = vrot.lane.b32.xlu0 %v1082, 48
        %v1166 = vpop.permute.xlu0 %1165
        %1167 = vrot.lane.b32.xlu0 %v1083, 48
        %v1168 = vpop.permute.xlu0 %1167
        %1169 = vrot.lane.b32.xlu0 %v1084, 48
        %v1170 = vpop.permute.xlu0 %1169
        %1171 = vrot.lane.b32.xlu0 %v1085, 48
        %v1172 = vpop.permute.xlu0 %1171
        %1173 = vrot.lane.b32.xlu0 %v1086, 48
        %v1174 = vpop.permute.xlu0 %1173
        %1175 = vrot.lane.b32.xlu0 %v1087, 48
        %v1176 = vpop.permute.xlu0 %1175
        %1177 = vrot.lane.b32.xlu0 %v1088, 48
        %v1178 = vpop.permute.xlu0 %1177
        %1179 = vrot.lane.b32.xlu0 %v1089, 48
        %v1180 = vpop.permute.xlu0 %1179
        %1181 = vrot.lane.b32.xlu0 %v1090, 48
        %v1182 = vpop.permute.xlu0 %1181
        %1183 = vrot.lane.b32.xlu0 %v1091, 48
        %v1184 = vpop.permute.xlu0 %1183
        %1185 = vrot.lane.b32.xlu0 %v1092, 48
        %v1186 = vpop.permute.xlu0 %1185
        %1187 = vrot.lane.b32.xlu0 %v1093, 48
        %v1188 = vpop.permute.xlu0 %1187
        %1189 = vrot.lane.b32.xlu0 %v1094, 48
        %v1190 = vpop.permute.xlu0 %1189
        %vm1191 = vcmask 195584
        %v1194 = vsel %vm1191, %v1012, %v1112
        %v1197 = vsel %vm1191, %v1013, %v1114
        %v1200 = vsel %vm1191, %v1014, %v1116
        %v1203 = vsel %vm1191, %v1015, %v1118
        %v1206 = vsel %vm1191, %v1016, %v1120
        %v1209 = vsel %vm1191, %v1017, %v1122
        %v1212 = vsel %vm1191, %v1018, %v1124
        %v1215 = vsel %vm1191, %v1019, %v1126
        %v1218 = vsel %vm1191, %v1020, %v1128
        %v1221 = vsel %vm1191, %v1021, %v1130
        %v1224 = vsel %vm1191, %v1022, %v1132
        %v1227 = vsel %vm1191, %v1023, %v1134
        %v1230 = vsel %vm1191, %v1024, %v1136
        %v1233 = vsel %vm1191, %v1025, %v1138
        %v1236 = vsel %vm1191, %v1026, %v1140
        %v1239 = vsel %vm1191, %v1027, %v1142
        %vm1240 = vcmask 392192
        %v1242 = vsel %vm1240, %v1194, %v1160
        %v1244 = vsel %vm1240, %v1197, %v1162
        %v1246 = vsel %vm1240, %v1200, %v1164
        %v1248 = vsel %vm1240, %v1203, %v1166
        %v1250 = vsel %vm1240, %v1206, %v1168
        %v1252 = vsel %vm1240, %v1209, %v1170
        %v1254 = vsel %vm1240, %v1212, %v1172
        %v1256 = vsel %vm1240, %v1215, %v1174
        %v1258 = vsel %vm1240, %v1218, %v1176
        %v1260 = vsel %vm1240, %v1221, %v1178
        %v1262 = vsel %vm1240, %v1224, %v1180
        %v1264 = vsel %vm1240, %v1227, %v1182
        %v1266 = vsel %vm1240, %v1230, %v1184
        %v1268 = vsel %vm1240, %v1233, %v1186
        %v1270 = vsel %vm1240, %v1236, %v1188
        %v1272 = vsel %vm1240, %v1239, %v1190
        %v1273 = vld [vmem:[#allocation7] sm:$0xf]
        %v1274 = vld [vmem:[#allocation7 + $0x4] sm:$0xf]
        %v1275 = vld [vmem:[#allocation7 + $0x8] sm:$0xf]
        %v1276 = vld [vmem:[#allocation7 + $0xc] sm:$0xf]
        %v1277 = vld [vmem:[#allocation7 + $0x10] sm:$0xf]
        %v1278 = vld [vmem:[#allocation7 + $0x14] sm:$0xf]
        %v1279 = vld [vmem:[#allocation7 + $0x18] sm:$0xf]
        %v1280 = vld [vmem:[#allocation7 + $0x1c] sm:$0xf]
        %v1281 = vld [vmem:[#allocation7 + $0x20] sm:$0xf]
        %v1291 = vunpack.c.l.b16 %v1273
        %v1292 = vunpack.c.l.b16 %v1274
        %v1293 = vunpack.c.l.b16 %v1275
        %v1294 = vunpack.c.l.b16 %v1276
        %v1295 = vunpack.c.l.b16 %v1277
        %v1296 = vunpack.c.l.b16 %v1278
        %v1297 = vunpack.c.l.b16 %v1279
        %v1298 = vunpack.c.l.b16 %v1280
        %v1299 = vunpack.c.l.b16 %v1281
        %v1300 = vpack.c.b16 %v1292, %v1291
        %v1301 = vpack.c.b16 %v1294, %v1293
        %v1302 = vpack.c.b16 %v1296, %v1295
        %v1303 = vpack.c.b16 %v1298, %v1297
        %v1304 = vpack.c.b16 %v1299, %v1299
        %vm1309 = vcmask 588800
        %v1310 = vsel %vm1309, %v1242, 0
        %v1312 = vsel %vm1309, %v1244, 0
        %v1314 = vsel %vm1309, %v1246, 0
        %v1316 = vsel %vm1309, %v1248, 0
        %v1318 = vsel %vm1309, %v1250, 0
        %v1320 = vsel %vm1309, %v1252, 0
        %v1322 = vsel %vm1309, %v1254, 0
        %v1324 = vsel %vm1309, %v1256, 0
        %v1326 = vsel %vm1309, %v1258, 0
        %v1328 = vsel %vm1309, %v1260, 0
        %v1330 = vsel %vm1309, %v1262, 0
        %v1332 = vsel %vm1309, %v1264, 0
        %v1334 = vsel %vm1309, %v1266, 0
        %v1336 = vsel %vm1309, %v1268, 0
        %v1338 = vsel %vm1309, %v1270, 0
        %v1340 = vsel %vm1309, %v1272, 0
        %vm1342 = vcmask 1043456
        %v1344 = vsel %vm1342, %v1304, 0
        %1346 = vmatprep.subr.bf16.mxu0 0
        %1347 = vmatpush1.bf16.msra.mxu0 %v1300
        %1348 = vmatprep.subr.bf16.mxu0 0
        %1349 = vmatpush1.bf16.msra.mxu0 %v1301
        %1350 = vmatprep.subr.bf16.mxu0 0
        %1351 = vmatpush1.bf16.msra.mxu0 %v1302
        %1352 = vmatprep.subr.bf16.mxu0 0
        %1353 = vmatpush1.bf16.msra.mxu0 %v1303
        %1354 = vmatprep.subr.bf16.mxu0 0
        %1355 = vmatpush1.bf16.msra.mxu0 %v1344
        %1356 = vmatprep.subr.bf16.mxu0 0
        %1357 = vmatpush1.bf16.msra.mxu0 0
        %1358 = vmatprep.subr.bf16.mxu0 0
        %1359 = vmatpush1.bf16.msra.mxu0 0
        %1360 = vmatprep.subr.bf16.mxu0 0
        %1361 = vmatpush1.bf16.msra.mxu0 0
        %1362 = vmatprep.subr.bf16.mxu0 0
        %1363 = vmatpush1.bf16.msra.mxu0 0
        %1364 = vmatprep.subr.bf16.mxu0 0
        %1365 = vmatpush1.bf16.msra.mxu0 0
        %1366 = vmatprep.subr.bf16.mxu0 0
        %1367 = vmatpush1.bf16.msra.mxu0 0
        %1368 = vmatprep.subr.bf16.mxu0 0
        %1369 = vmatpush1.bf16.msra.mxu0 0
        %1370 = vmatprep.subr.bf16.mxu0 0
        %1371 = vmatpush1.bf16.msra.mxu0 0
        %1372 = vmatprep.subr.bf16.mxu0 0
        %1373 = vmatpush1.bf16.msra.mxu0 0
        %1374 = vmatprep.subr.bf16.mxu0 0
        %1375 = vmatpush1.bf16.msra.mxu0 0
        %1376 = vmatprep.subr.bf16.mxu0 0
        %1377 = vmatpush1.bf16.msra.mxu0 0
        %1378 = vmatprep.mubr.bf16.mxu0 0
        %1379 = vmatmul.mubr.bf16.gmra.mrb[0].mxu0 %v1310
        %v1380 = vpop.f32.mrb[0].mxu0
        %v1381 = vadd.f32 0.0, %v1380
        %v1382 = vpop.f32.mrb[0].mxu0
        %v1383 = vpop.f32.mrb[0].mxu0
        %v1384 = vadd.f32 0.0, %v1383
        %v1385 = vpop.f32.mrb[0].mxu0
        %1386 = vmatprep.mubr.bf16.mxu0 0
        %1387 = vmatmul.mubr.bf16.gmra.mrb[0].mxu0 %v1312
        %v1388 = vpop.f32.mrb[0].mxu0
        %v1389 = vadd.f32 0.0, %v1388
        %v1390 = vpop.f32.mrb[0].mxu0
        %v1391 = vpop.f32.mrb[0].mxu0
        %v1392 = vadd.f32 0.0, %v1391
        %v1393 = vpop.f32.mrb[0].mxu0
        %1394 = vmatprep.mubr.bf16.mxu0 0
        %1395 = vmatmul.mubr.bf16.gmra.mrb[0].mxu0 %v1314
        %v1396 = vpop.f32.mrb[0].mxu0
        %v1397 = vadd.f32 0.0, %v1396
        %v1398 = vpop.f32.mrb[0].mxu0
        %v1399 = vpop.f32.mrb[0].mxu0
        %v1400 = vadd.f32 0.0, %v1399
        %v1401 = vpop.f32.mrb[0].mxu0
        %1402 = vmatprep.mubr.bf16.mxu0 0
        %1403 = vmatmul.mubr.bf16.gmra.mrb[0].mxu0 %v1316
        %v1404 = vpop.f32.mrb[0].mxu0
        %v1405 = vadd.f32 0.0, %v1404
        %v1406 = vpop.f32.mrb[0].mxu0
        %v1407 = vpop.f32.mrb[0].mxu0
        %v1408 = vadd.f32 0.0, %v1407
        %v1409 = vpop.f32.mrb[0].mxu0
        %1410 = vmatprep.mubr.bf16.mxu0 0
        %1411 = vmatmul.mubr.bf16.gmra.mrb[0].mxu0 %v1318
        %v1412 = vpop.f32.mrb[0].mxu0
        %v1413 = vadd.f32 0.0, %v1412
        %v1414 = vpop.f32.mrb[0].mxu0
        %v1415 = vpop.f32.mrb[0].mxu0
        %v1416 = vadd.f32 0.0, %v1415
        %v1417 = vpop.f32.mrb[0].mxu0
        %1418 = vmatprep.mubr.bf16.mxu0 0
        %1419 = vmatmul.mubr.bf16.gmra.mrb[0].mxu0 %v1320
        %v1420 = vpop.f32.mrb[0].mxu0
        %v1421 = vadd.f32 0.0, %v1420
        %v1422 = vpop.f32.mrb[0].mxu0
        %v1423 = vpop.f32.mrb[0].mxu0
        %v1424 = vadd.f32 0.0, %v1423
        %v1425 = vpop.f32.mrb[0].mxu0
        %1426 = vmatprep.mubr.bf16.mxu0 0
        %1427 = vmatmul.mubr.bf16.gmra.mrb[0].mxu0 %v1322
        %v1428 = vpop.f32.mrb[0].mxu0
        %v1429 = vadd.f32 0.0, %v1428
        %v1430 = vpop.f32.mrb[0].mxu0
        %v1431 = vpop.f32.mrb[0].mxu0
        %v1432 = vadd.f32 0.0, %v1431
        %v1433 = vpop.f32.mrb[0].mxu0
        %1434 = vmatprep.mubr.bf16.mxu0 0
        %1435 = vmatmul.mubr.bf16.gmra.mrb[0].mxu0 %v1324
        %v1436 = vpop.f32.mrb[0].mxu0
        %v1437 = vadd.f32 0.0, %v1436
        %v1438 = vpop.f32.mrb[0].mxu0
        %v1439 = vpop.f32.mrb[0].mxu0
        %v1440 = vadd.f32 0.0, %v1439
        %v1441 = vpop.f32.mrb[0].mxu0
        %1442 = vmatprep.mubr.bf16.mxu0 0
        %1443 = vmatmul.mubr.bf16.gmra.mrb[0].mxu0 %v1326
        %v1444 = vpop.f32.mrb[0].mxu0
        %v1445 = vadd.f32 0.0, %v1444
        %v1446 = vpop.f32.mrb[0].mxu0
        %v1447 = vpop.f32.mrb[0].mxu0
        %v1448 = vadd.f32 0.0, %v1447
        %v1449 = vpop.f32.mrb[0].mxu0
        %1450 = vmatprep.mubr.bf16.mxu0 0
        %1451 = vmatmul.mubr.bf16.gmra.mrb[0].mxu0 %v1328
        %v1452 = vpop.f32.mrb[0].mxu0
        %v1453 = vadd.f32 0.0, %v1452
        %v1454 = vpop.f32.mrb[0].mxu0
        %v1455 = vpop.f32.mrb[0].mxu0
        %v1456 = vadd.f32 0.0, %v1455
        %v1457 = vpop.f32.mrb[0].mxu0
        %1458 = vmatprep.mubr.bf16.mxu0 0
        %1459 = vmatmul.mubr.bf16.gmra.mrb[0].mxu0 %v1330
        %v1460 = vpop.f32.mrb[0].mxu0
        %v1461 = vadd.f32 0.0, %v1460
        %v1462 = vpop.f32.mrb[0].mxu0
        %v1463 = vpop.f32.mrb[0].mxu0
        %v1464 = vadd.f32 0.0, %v1463
        %v1465 = vpop.f32.mrb[0].mxu0
        %1466 = vmatprep.mubr.bf16.mxu0 0
        %1467 = vmatmul.mubr.bf16.gmra.mrb[0].mxu0 %v1332
        %v1468 = vpop.f32.mrb[0].mxu0
        %v1469 = vadd.f32 0.0, %v1468
        %v1470 = vpop.f32.mrb[0].mxu0
        %v1471 = vpop.f32.mrb[0].mxu0
        %v1472 = vadd.f32 0.0, %v1471
        %v1473 = vpop.f32.mrb[0].mxu0
        %1474 = vmatprep.mubr.bf16.mxu0 0
        %1475 = vmatmul.mubr.bf16.gmra.mrb[0].mxu0 %v1334
        %v1476 = vpop.f32.mrb[0].mxu0
        %v1477 = vadd.f32 0.0, %v1476
        %v1478 = vpop.f32.mrb[0].mxu0
        %v1479 = vpop.f32.mrb[0].mxu0
        %v1480 = vadd.f32 0.0, %v1479
        %v1481 = vpop.f32.mrb[0].mxu0
        %1482 = vmatprep.mubr.bf16.mxu0 0
        %1483 = vmatmul.mubr.bf16.gmra.mrb[0].mxu0 %v1336
        %v1484 = vpop.f32.mrb[0].mxu0
        %v1485 = vadd.f32 0.0, %v1484
        %v1486 = vpop.f32.mrb[0].mxu0
        %v1487 = vpop.f32.mrb[0].mxu0
        %v1488 = vadd.f32 0.0, %v1487
        %v1489 = vpop.f32.mrb[0].mxu0
        %1490 = vmatprep.mubr.bf16.mxu0 0
        %1491 = vmatmul.mubr.bf16.gmra.mrb[0].mxu0 %v1338
        %v1492 = vpop.f32.mrb[0].mxu0
        %v1493 = vadd.f32 0.0, %v1492
        %v1494 = vpop.f32.mrb[0].mxu0
        %v1495 = vpop.f32.mrb[0].mxu0
        %v1496 = vadd.f32 0.0, %v1495
        %v1497 = vpop.f32.mrb[0].mxu0
        %1498 = vmatprep.mubr.bf16.mxu0 0
        %1499 = vmatmul.mubr.bf16.gmra.mrb[0].mxu0 %v1340
        %v1500 = vpop.f32.mrb[0].mxu0
        %v1501 = vadd.f32 0.0, %v1500
        %v1502 = vpop.f32.mrb[0].mxu0
        %v1503 = vpop.f32.mrb[0].mxu0
        %v1504 = vadd.f32 0.0, %v1503
        %v1505 = vpop.f32.mrb[0].mxu0
        %1506 = vdwg.mxu0
        %v1507 = vld [vmem:[#allocation8] sm:$0x1]
        %v1509 = vlaneseq
        %v1510 = vshrl.u32 %v1509, 7
        %v1511 = vsub.s32 0, %v1510
        %v1512 = vrot.slane %v1507, %v1511
        %v1514 = vmul.f32 %v1381, %v1512
        %v1515 = vmul.f32 %v1384, %v1512
        %v1516 = vmul.f32 %v1389, %v1512
        %v1517 = vmul.f32 %v1392, %v1512
        %v1518 = vmul.f32 %v1397, %v1512
        %v1519 = vmul.f32 %v1400, %v1512
        %v1520 = vmul.f32 %v1405, %v1512
        %v1521 = vmul.f32 %v1408, %v1512
        %v1522 = vmul.f32 %v1413, %v1512
        %v1523 = vmul.f32 %v1416, %v1512
        %v1524 = vmul.f32 %v1421, %v1512
        %v1525 = vmul.f32 %v1424, %v1512
        %v1526 = vmul.f32 %v1429, %v1512
        %v1527 = vmul.f32 %v1432, %v1512
        %v1528 = vmul.f32 %v1437, %v1512
        %v1529 = vmul.f32 %v1440, %v1512
        %v1530 = vmul.f32 %v1445, %v1512
        %v1531 = vmul.f32 %v1448, %v1512
        %v1532 = vmul.f32 %v1453, %v1512
        %v1533 = vmul.f32 %v1456, %v1512
        %v1534 = vmul.f32 %v1461, %v1512
        %v1535 = vmul.f32 %v1464, %v1512
        %v1536 = vmul.f32 %v1469, %v1512
        %v1537 = vmul.f32 %v1472, %v1512
        %v1538 = vmul.f32 %v1477, %v1512
        %v1539 = vmul.f32 %v1480, %v1512
        %v1540 = vmul.f32 %v1485, %v1512
        %v1541 = vmul.f32 %v1488, %v1512
        %v1542 = vmul.f32 %v1493, %v1512
        %v1543 = vmul.f32 %v1496, %v1512
        %v1544 = vmul.f32 %v1501, %v1512
        %v1545 = vmul.f32 %v1504, %v1512
        %v1546 = vld [vmem:[#allocation10] sm:$0x1]
        %v1548 = vlaneseq
        %v1549 = vshrl.u32 %v1548, 7
        %v1550 = vsub.s32 0, %v1549
        %v1551 = vrot.slane %v1546, %v1550
        %v1553 = vadd.f32 %v1514, %v1551
        %v1554 = vadd.f32 %v1515, %v1551
        %v1555 = vadd.f32 %v1516, %v1551
        %v1556 = vadd.f32 %v1517, %v1551
        %v1557 = vadd.f32 %v1518, %v1551
        %v1558 = vadd.f32 %v1519, %v1551
        %v1559 = vadd.f32 %v1520, %v1551
        %v1560 = vadd.f32 %v1521, %v1551
        %v1561 = vadd.f32 %v1522, %v1551
        %v1562 = vadd.f32 %v1523, %v1551
        %v1563 = vadd.f32 %v1524, %v1551
        %v1564 = vadd.f32 %v1525, %v1551
        %v1565 = vadd.f32 %v1526, %v1551
        %v1566 = vadd.f32 %v1527, %v1551
        %v1567 = vadd.f32 %v1528, %v1551
        %v1568 = vadd.f32 %v1529, %v1551
        %v1569 = vadd.f32 %v1530, %v1551
        %v1570 = vadd.f32 %v1531, %v1551
        %v1571 = vadd.f32 %v1532, %v1551
        %v1572 = vadd.f32 %v1533, %v1551
        %v1573 = vadd.f32 %v1534, %v1551
        %v1574 = vadd.f32 %v1535, %v1551
        %v1575 = vadd.f32 %v1536, %v1551
        %v1576 = vadd.f32 %v1537, %v1551
        %v1577 = vadd.f32 %v1538, %v1551
        %v1578 = vadd.f32 %v1539, %v1551
        %v1579 = vadd.f32 %v1540, %v1551
        %v1580 = vadd.f32 %v1541, %v1551
        %v1581 = vadd.f32 %v1542, %v1551
        %v1582 = vadd.f32 %v1543, %v1551
        %v1583 = vadd.f32 %v1544, %v1551
        %v1584 = vadd.f32 %v1545, %v1551
        %v1585 = vmax.f32 %v1553, 0.0
        %v1586 = vmax.f32 %v1554, 0.0
        %v1587 = vmax.f32 %v1555, 0.0
        %v1588 = vmax.f32 %v1556, 0.0
        %v1589 = vmax.f32 %v1557, 0.0
        %v1590 = vmax.f32 %v1558, 0.0
        %v1591 = vmax.f32 %v1559, 0.0
        %v1592 = vmax.f32 %v1560, 0.0
        %v1593 = vmax.f32 %v1561, 0.0
        %v1594 = vmax.f32 %v1562, 0.0
        %v1595 = vmax.f32 %v1563, 0.0
        %v1596 = vmax.f32 %v1564, 0.0
        %v1597 = vmax.f32 %v1565, 0.0
        %v1598 = vmax.f32 %v1566, 0.0
        %v1599 = vmax.f32 %v1567, 0.0
        %v1600 = vmax.f32 %v1568, 0.0
        %v1601 = vmax.f32 %v1569, 0.0
        %v1602 = vmax.f32 %v1570, 0.0
        %v1603 = vmax.f32 %v1571, 0.0
        %v1604 = vmax.f32 %v1572, 0.0
        %v1605 = vmax.f32 %v1573, 0.0
        %v1606 = vmax.f32 %v1574, 0.0
        %v1607 = vmax.f32 %v1575, 0.0
        %v1608 = vmax.f32 %v1576, 0.0
        %v1609 = vmax.f32 %v1577, 0.0
        %v1610 = vmax.f32 %v1578, 0.0
        %v1611 = vmax.f32 %v1579, 0.0
        %v1612 = vmax.f32 %v1580, 0.0
        %v1613 = vmax.f32 %v1581, 0.0
        %v1614 = vmax.f32 %v1582, 0.0
        %v1615 = vmax.f32 %v1583, 0.0
        %v1616 = vmax.f32 %v1584, 0.0
        %v1617 = vpack.c.bf16 %v1586, %v1585
        %v1618 = vpack.c.bf16 %v1588, %v1587
        %v1619 = vpack.c.bf16 %v1590, %v1589
        %v1620 = vpack.c.bf16 %v1592, %v1591
        %v1621 = vpack.c.bf16 %v1594, %v1593
        %v1622 = vpack.c.bf16 %v1596, %v1595
        %v1623 = vpack.c.bf16 %v1598, %v1597
        %v1624 = vpack.c.bf16 %v1600, %v1599
        %v1625 = vpack.c.bf16 %v1602, %v1601
        %v1626 = vpack.c.bf16 %v1604, %v1603
        %v1627 = vpack.c.bf16 %v1606, %v1605
        %v1628 = vpack.c.bf16 %v1608, %v1607
        %v1629 = vpack.c.bf16 %v1610, %v1609
        %v1630 = vpack.c.bf16 %v1612, %v1611
        %v1631 = vpack.c.bf16 %v1614, %v1613
        %v1632 = vpack.c.bf16 %v1616, %v1615
        %1649 = vrot.lane.b32.xlu0 %v1617, 4
        %v1650 = vpop.permute.xlu0 %1649
        %1651 = vrot.lane.b32.xlu0 %v1618, 4
        %v1652 = vpop.permute.xlu0 %1651
        %1653 = vrot.lane.b32.xlu0 %v1619, 4
        %v1654 = vpop.permute.xlu0 %1653
        %1655 = vrot.lane.b32.xlu0 %v1620, 4
        %v1656 = vpop.permute.xlu0 %1655
        %1657 = vrot.lane.b32.xlu0 %v1621, 4
        %v1658 = vpop.permute.xlu0 %1657
        %1659 = vrot.lane.b32.xlu0 %v1622, 4
        %v1660 = vpop.permute.xlu0 %1659
        %1661 = vrot.lane.b32.xlu0 %v1623, 4
        %v1662 = vpop.permute.xlu0 %1661
        %1663 = vrot.lane.b32.xlu0 %v1624, 4
        %v1664 = vpop.permute.xlu0 %1663
        %1665 = vrot.lane.b32.xlu0 %v1625, 4
        %v1666 = vpop.permute.xlu0 %1665
        %1667 = vrot.lane.b32.xlu0 %v1626, 4
        %v1668 = vpop.permute.xlu0 %1667
        %1669 = vrot.lane.b32.xlu0 %v1627, 4
        %v1670 = vpop.permute.xlu0 %1669
        %1671 = vrot.lane.b32.xlu0 %v1628, 4
        %v1672 = vpop.permute.xlu0 %1671
        %1673 = vrot.lane.b32.xlu0 %v1629, 4
        %v1674 = vpop.permute.xlu0 %1673
        %1675 = vrot.lane.b32.xlu0 %v1630, 4
        %v1676 = vpop.permute.xlu0 %1675
        %1677 = vrot.lane.b32.xlu0 %v1631, 4
        %v1678 = vpop.permute.xlu0 %1677
        %1679 = vrot.lane.b32.xlu0 %v1632, 4
        %v1680 = vpop.permute.xlu0 %1679
        %1681 = vrot.lane.b32.xlu0 %v1618, 8
        %v1682 = vpop.permute.xlu0 %1681
        %1683 = vrot.lane.b32.xlu0 %v1619, 8
        %v1684 = vpop.permute.xlu0 %1683
        %1685 = vrot.lane.b32.xlu0 %v1620, 8
        %v1686 = vpop.permute.xlu0 %1685
        %1687 = vrot.lane.b32.xlu0 %v1621, 8
        %v1688 = vpop.permute.xlu0 %1687
        %1689 = vrot.lane.b32.xlu0 %v1622, 8
        %v1690 = vpop.permute.xlu0 %1689
        %1691 = vrot.lane.b32.xlu0 %v1623, 8
        %v1692 = vpop.permute.xlu0 %1691
        %1693 = vrot.lane.b32.xlu0 %v1624, 8
        %v1694 = vpop.permute.xlu0 %1693
        %1695 = vrot.lane.b32.xlu0 %v1625, 8
        %v1696 = vpop.permute.xlu0 %1695
        %1697 = vrot.lane.b32.xlu0 %v1626, 8
        %v1698 = vpop.permute.xlu0 %1697
        %1699 = vrot.lane.b32.xlu0 %v1627, 8
        %v1700 = vpop.permute.xlu0 %1699
        %1701 = vrot.lane.b32.xlu0 %v1628, 8
        %v1702 = vpop.permute.xlu0 %1701
        %1703 = vrot.lane.b32.xlu0 %v1629, 8
        %v1704 = vpop.permute.xlu0 %1703
        %1705 = vrot.lane.b32.xlu0 %v1630, 8
        %v1706 = vpop.permute.xlu0 %1705
        %1707 = vrot.lane.b32.xlu0 %v1631, 8
        %v1708 = vpop.permute.xlu0 %1707
        %1709 = vrot.lane.b32.xlu0 %v1632, 8
        %v1710 = vpop.permute.xlu0 %1709
        %1711 = vrot.lane.b32.xlu0 0, 8
        %v1712 = vpop.permute.xlu0 %1711
        %v1714 = vsel %vm700, 0, %v1650
        %v1717 = vsel %vm700, %v1617, %v1652
        %v1720 = vsel %vm700, %v1618, %v1654
        %v1723 = vsel %vm700, %v1619, %v1656
        %v1726 = vsel %vm700, %v1620, %v1658
        %v1729 = vsel %vm700, %v1621, %v1660
        %v1732 = vsel %vm700, %v1622, %v1662
        %v1735 = vsel %vm700, %v1623, %v1664
        %v1738 = vsel %vm700, %v1624, %v1666
        %v1741 = vsel %vm700, %v1625, %v1668
        %v1744 = vsel %vm700, %v1626, %v1670
        %v1747 = vsel %vm700, %v1627, %v1672
        %v1750 = vsel %vm700, %v1628, %v1674
        %v1753 = vsel %vm700, %v1629, %v1676
        %v1756 = vsel %vm700, %v1630, %v1678
        %v1759 = vsel %vm700, %v1631, %v1680
        %v1761 = vsel %vm830, %v1714, %v1682
        %v1763 = vsel %vm830, %v1717, %v1684
        %v1765 = vsel %vm830, %v1720, %v1686
        %v1767 = vsel %vm830, %v1723, %v1688
        %v1769 = vsel %vm830, %v1726, %v1690
        %v1771 = vsel %vm830, %v1729, %v1692
        %v1773 = vsel %vm830, %v1732, %v1694
        %v1775 = vsel %vm830, %v1735, %v1696
        %v1777 = vsel %vm830, %v1738, %v1698
        %v1779 = vsel %vm830, %v1741, %v1700
        %v1781 = vsel %vm830, %v1744, %v1702
        %v1783 = vsel %vm830, %v1747, %v1704
        %v1785 = vsel %vm830, %v1750, %v1706
        %v1787 = vsel %vm830, %v1753, %v1708
        %v1789 = vsel %vm830, %v1756, %v1710
        %v1791 = vsel %vm830, %v1759, %v1712
        %v1792 = vshrl.u32 %v1761, 16
        %v1794 = vrot.slane %v1792, 7
        %v1795 = vshll.u32 %v1761, 16
        %v1797 = vor.u32 %v1794, %v1795
        %v1798 = vshrl.u32 %v1763, 16
        %v1800 = vrot.slane %v1798, 7
        %v1801 = vshll.u32 %v1763, 16
        %v1803 = vor.u32 %v1800, %v1801
        %v1804 = vshrl.u32 %v1765, 16
        %v1806 = vrot.slane %v1804, 7
        %v1807 = vshll.u32 %v1765, 16
        %v1809 = vor.u32 %v1806, %v1807
        %v1810 = vshrl.u32 %v1767, 16
        %v1812 = vrot.slane %v1810, 7
        %v1813 = vshll.u32 %v1767, 16
        %v1815 = vor.u32 %v1812, %v1813
        %v1816 = vshrl.u32 %v1769, 16
        %v1818 = vrot.slane %v1816, 7
        %v1819 = vshll.u32 %v1769, 16
        %v1821 = vor.u32 %v1818, %v1819
        %v1822 = vshrl.u32 %v1771, 16
        %v1824 = vrot.slane %v1822, 7
        %v1825 = vshll.u32 %v1771, 16
        %v1827 = vor.u32 %v1824, %v1825
        %v1828 = vshrl.u32 %v1773, 16
        %v1830 = vrot.slane %v1828, 7
        %v1831 = vshll.u32 %v1773, 16
        %v1833 = vor.u32 %v1830, %v1831
        %v1834 = vshrl.u32 %v1775, 16
        %v1836 = vrot.slane %v1834, 7
        %v1837 = vshll.u32 %v1775, 16
        %v1839 = vor.u32 %v1836, %v1837
        %v1840 = vshrl.u32 %v1777, 16
        %v1842 = vrot.slane %v1840, 7
        %v1843 = vshll.u32 %v1777, 16
        %v1845 = vor.u32 %v1842, %v1843
        %v1846 = vshrl.u32 %v1779, 16
        %v1848 = vrot.slane %v1846, 7
        %v1849 = vshll.u32 %v1779, 16
        %v1851 = vor.u32 %v1848, %v1849
        %v1852 = vshrl.u32 %v1781, 16
        %v1854 = vrot.slane %v1852, 7
        %v1855 = vshll.u32 %v1781, 16
        %v1857 = vor.u32 %v1854, %v1855
        %v1858 = vshrl.u32 %v1783, 16
        %v1860 = vrot.slane %v1858, 7
        %v1861 = vshll.u32 %v1783, 16
        %v1863 = vor.u32 %v1860, %v1861
        %v1864 = vshrl.u32 %v1785, 16
        %v1866 = vrot.slane %v1864, 7
        %v1867 = vshll.u32 %v1785, 16
        %v1869 = vor.u32 %v1866, %v1867
        %v1870 = vshrl.u32 %v1787, 16
        %v1872 = vrot.slane %v1870, 7
        %v1873 = vshll.u32 %v1787, 16
        %v1875 = vor.u32 %v1872, %v1873
        %v1876 = vshrl.u32 %v1789, 16
        %v1878 = vrot.slane %v1876, 7
        %v1879 = vshll.u32 %v1789, 16
        %v1881 = vor.u32 %v1878, %v1879
        %v1882 = vshrl.u32 %v1791, 16
        %v1884 = vrot.slane %v1882, 7
        %v1885 = vshll.u32 %v1791, 16
        %v1887 = vor.u32 %v1884, %v1885
        %v1904 = vsel %vm1011, 0, %v1797
        %v1905 = vsel %vm1011, 0, %v1803
        %v1906 = vsel %vm1011, 0, %v1809
        %v1907 = vsel %vm1011, 0, %v1815
        %v1908 = vsel %vm1011, 0, %v1821
        %v1909 = vsel %vm1011, 0, %v1827
        %v1910 = vsel %vm1011, 0, %v1833
        %v1911 = vsel %vm1011, 0, %v1839
        %v1912 = vsel %vm1011, 0, %v1845
        %v1913 = vsel %vm1011, 0, %v1851
        %v1914 = vsel %vm1011, 0, %v1857
        %v1915 = vsel %vm1011, 0, %v1863
        %v1916 = vsel %vm1011, 0, %v1869
        %v1917 = vsel %vm1011, 0, %v1875
        %v1918 = vsel %vm1011, 0, %v1881
        %v1919 = vsel %vm1011, 0, %v1887
        %v1920 = vrot.slane %v1795, 1
        %v1921 = vor.u32 %v1792, %v1920
        %v1922 = vrot.slane %v1801, 1
        %v1923 = vor.u32 %v1798, %v1922
        %v1924 = vrot.slane %v1807, 1
        %v1925 = vor.u32 %v1804, %v1924
        %v1926 = vrot.slane %v1813, 1
        %v1927 = vor.u32 %v1810, %v1926
        %v1928 = vrot.slane %v1819, 1
        %v1929 = vor.u32 %v1816, %v1928
        %v1930 = vrot.slane %v1825, 1
        %v1931 = vor.u32 %v1822, %v1930
        %v1932 = vrot.slane %v1831, 1
        %v1933 = vor.u32 %v1828, %v1932
        %v1934 = vrot.slane %v1837, 1
        %v1935 = vor.u32 %v1834, %v1934
        %v1936 = vrot.slane %v1843, 1
        %v1937 = vor.u32 %v1840, %v1936
        %v1938 = vrot.slane %v1849, 1
        %v1939 = vor.u32 %v1846, %v1938
        %v1940 = vrot.slane %v1855, 1
        %v1941 = vor.u32 %v1852, %v1940
        %v1942 = vrot.slane %v1861, 1
        %v1943 = vor.u32 %v1858, %v1942
        %v1944 = vrot.slane %v1867, 1
        %v1945 = vor.u32 %v1864, %v1944
        %v1946 = vrot.slane %v1873, 1
        %v1947 = vor.u32 %v1870, %v1946
        %v1948 = vrot.slane %v1879, 1
        %v1949 = vor.u32 %v1876, %v1948
        %v1950 = vrot.slane %v1885, 1
        %v1951 = vor.u32 %v1882, %v1950
        %v1968 = vsel %vm1078, %v1921, 0
        %v1969 = vsel %vm1078, %v1923, 0
        %v1970 = vsel %vm1078, %v1925, 0
        %v1971 = vsel %vm1078, %v1927, 0
        %v1972 = vsel %vm1078, %v1929, 0
        %v1973 = vsel %vm1078, %v1931, 0
        %v1974 = vsel %vm1078, %v1933, 0
        %v1975 = vsel %vm1078, %v1935, 0
        %v1976 = vsel %vm1078, %v1937, 0
        %v1977 = vsel %vm1078, %v1939, 0
        %v1978 = vsel %vm1078, %v1941, 0
        %v1979 = vsel %vm1078, %v1943, 0
        %v1980 = vsel %vm1078, %v1945, 0
        %v1981 = vsel %vm1078, %v1947, 0
        %v1982 = vsel %vm1078, %v1949, 0
        %v1983 = vsel %vm1078, %v1951, 0
        %2000 = vrot.lane.b32.xlu0 %v1761, 12
        %v2001 = vpop.permute.xlu0 %2000
        %2002 = vrot.lane.b32.xlu0 %v1763, 12
        %v2003 = vpop.permute.xlu0 %2002
        %2004 = vrot.lane.b32.xlu0 %v1765, 12
        %v2005 = vpop.permute.xlu0 %2004
        %2006 = vrot.lane.b32.xlu0 %v1767, 12
        %v2007 = vpop.permute.xlu0 %2006
        %2008 = vrot.lane.b32.xlu0 %v1769, 12
        %v2009 = vpop.permute.xlu0 %2008
        %2010 = vrot.lane.b32.xlu0 %v1771, 12
        %v2011 = vpop.permute.xlu0 %2010
        %2012 = vrot.lane.b32.xlu0 %v1773, 12
        %v2013 = vpop.permute.xlu0 %2012
        %2014 = vrot.lane.b32.xlu0 %v1775, 12
        %v2015 = vpop.permute.xlu0 %2014
        %2016 = vrot.lane.b32.xlu0 %v1777, 12
        %v2017 = vpop.permute.xlu0 %2016
        %2018 = vrot.lane.b32.xlu0 %v1779, 12
        %v2019 = vpop.permute.xlu0 %2018
        %2020 = vrot.lane.b32.xlu0 %v1781, 12
        %v2021 = vpop.permute.xlu0 %2020
        %2022 = vrot.lane.b32.xlu0 %v1783, 12
        %v2023 = vpop.permute.xlu0 %2022
        %2024 = vrot.lane.b32.xlu0 %v1785, 12
        %v2025 = vpop.permute.xlu0 %2024
        %2026 = vrot.lane.b32.xlu0 %v1787, 12
        %v2027 = vpop.permute.xlu0 %2026
        %2028 = vrot.lane.b32.xlu0 %v1789, 12
        %v2029 = vpop.permute.xlu0 %2028
        %2030 = vrot.lane.b32.xlu0 %v1791, 12
        %v2031 = vpop.permute.xlu0 %2030
        %2048 = vrot.lane.b32.xlu0 %v1968, 24
        %v2049 = vpop.permute.xlu0 %2048
        %2050 = vrot.lane.b32.xlu0 %v1969, 24
        %v2051 = vpop.permute.xlu0 %2050
        %2052 = vrot.lane.b32.xlu0 %v1970, 24
        %v2053 = vpop.permute.xlu0 %2052
        %2054 = vrot.lane.b32.xlu0 %v1971, 24
        %v2055 = vpop.permute.xlu0 %2054
        %2056 = vrot.lane.b32.xlu0 %v1972, 24
        %v2057 = vpop.permute.xlu0 %2056
        %2058 = vrot.lane.b32.xlu0 %v1973, 24
        %v2059 = vpop.permute.xlu0 %2058
        %2060 = vrot.lane.b32.xlu0 %v1974, 24
        %v2061 = vpop.permute.xlu0 %2060
        %2062 = vrot.lane.b32.xlu0 %v1975, 24
        %v2063 = vpop.permute.xlu0 %2062
        %2064 = vrot.lane.b32.xlu0 %v1976, 24
        %v2065 = vpop.permute.xlu0 %2064
        %2066 = vrot.lane.b32.xlu0 %v1977, 24
        %v2067 = vpop.permute.xlu0 %2066
        %2068 = vrot.lane.b32.xlu0 %v1978, 24
        %v2069 = vpop.permute.xlu0 %2068
        %2070 = vrot.lane.b32.xlu0 %v1979, 24
        %v2071 = vpop.permute.xlu0 %2070
        %2072 = vrot.lane.b32.xlu0 %v1980, 24
        %v2073 = vpop.permute.xlu0 %2072
        %2074 = vrot.lane.b32.xlu0 %v1981, 24
        %v2075 = vpop.permute.xlu0 %2074
        %2076 = vrot.lane.b32.xlu0 %v1982, 24
        %v2077 = vpop.permute.xlu0 %2076
        %2078 = vrot.lane.b32.xlu0 %v1983, 24
        %v2079 = vpop.permute.xlu0 %2078
        %vm2080 = vcmask 97280
        %v2083 = vsel %vm2080, %v1904, %v2001
        %v2086 = vsel %vm2080, %v1905, %v2003
        %v2089 = vsel %vm2080, %v1906, %v2005
        %v2092 = vsel %vm2080, %v1907, %v2007
        %v2095 = vsel %vm2080, %v1908, %v2009
        %v2098 = vsel %vm2080, %v1909, %v2011
        %v2101 = vsel %vm2080, %v1910, %v2013
        %v2104 = vsel %vm2080, %v1911, %v2015
        %v2107 = vsel %vm2080, %v1912, %v2017
        %v2110 = vsel %vm2080, %v1913, %v2019
        %v2113 = vsel %vm2080, %v1914, %v2021
        %v2116 = vsel %vm2080, %v1915, %v2023
        %v2119 = vsel %vm2080, %v1916, %v2025
        %v2122 = vsel %vm2080, %v1917, %v2027
        %v2125 = vsel %vm2080, %v1918, %v2029
        %v2128 = vsel %vm2080, %v1919, %v2031
        %v2130 = vsel %vm1191, %v2083, %v2049
        %v2132 = vsel %vm1191, %v2086, %v2051
        %v2134 = vsel %vm1191, %v2089, %v2053
        %v2136 = vsel %vm1191, %v2092, %v2055
        %v2138 = vsel %vm1191, %v2095, %v2057
        %v2140 = vsel %vm1191, %v2098, %v2059
        %v2142 = vsel %vm1191, %v2101, %v2061
        %v2144 = vsel %vm1191, %v2104, %v2063
        %v2146 = vsel %vm1191, %v2107, %v2065
        %v2148 = vsel %vm1191, %v2110, %v2067
        %v2150 = vsel %vm1191, %v2113, %v2069
        %v2152 = vsel %vm1191, %v2116, %v2071
        %v2154 = vsel %vm1191, %v2119, %v2073
        %v2156 = vsel %vm1191, %v2122, %v2075
        %v2158 = vsel %vm1191, %v2125, %v2077
        %v2160 = vsel %vm1191, %v2128, %v2079
        %v2161 = vld [vmem:[#allocation11] sm:$0xf]
        %v2162 = vld [vmem:[#allocation11 + $0x4] sm:$0xf]
        %v2163 = vld [vmem:[#allocation11 + $0x8] sm:$0xf]
        %v2164 = vld [vmem:[#allocation11 + $0xc] sm:$0xf]
        %v2165 = vld [vmem:[#allocation11 + $0x10] sm:$0x3]
        %v2171 = vunpack.c.l.b16 %v2161
        %v2172 = vunpack.c.l.b16 %v2162
        %v2173 = vunpack.c.l.b16 %v2163
        %v2174 = vunpack.c.l.b16 %v2164
        %v2175 = vunpack.c.l.b16 %v2165
        %v2176 = vpack.c.b16 %v2172, %v2171
        %v2177 = vpack.c.b16 %v2174, %v2173
        %v2178 = vpack.c.b16 %v2175, %v2175
        %vm2181 = vcmask 293888
        %v2182 = vsel %vm2181, %v2130, 0
        %v2184 = vsel %vm2181, %v2132, 0
        %v2186 = vsel %vm2181, %v2134, 0
        %v2188 = vsel %vm2181, %v2136, 0
        %v2190 = vsel %vm2181, %v2138, 0
        %v2192 = vsel %vm2181, %v2140, 0
        %v2194 = vsel %vm2181, %v2142, 0
        %v2196 = vsel %vm2181, %v2144, 0
        %v2198 = vsel %vm2181, %v2146, 0
        %v2200 = vsel %vm2181, %v2148, 0
        %v2202 = vsel %vm2181, %v2150, 0
        %v2204 = vsel %vm2181, %v2152, 0
        %v2206 = vsel %vm2181, %v2154, 0
        %v2208 = vsel %vm2181, %v2156, 0
        %v2210 = vsel %vm2181, %v2158, 0
        %v2212 = vsel %vm2181, %v2160, 0
        %vm2214 = vcmask 1041408
        %v2216 = vsel %vm2214, %v2178, 0
        %2218 = vmatprep.subr.bf16.mxu0 0
        %2219 = vmatpush1.bf16.msra.mxu0 %v2176
        %2220 = vmatprep.subr.bf16.mxu0 0
        %2221 = vmatpush1.bf16.msra.mxu0 %v2177
        %2222 = vmatprep.subr.bf16.mxu0 0
        %2223 = vmatpush1.bf16.msra.mxu0 %v2216
        %2224 = vmatprep.subr.bf16.mxu0 0
        %2225 = vmatpush1.bf16.msra.mxu0 0
        %2226 = vmatprep.subr.bf16.mxu0 0
        %2227 = vmatpush1.bf16.msra.mxu0 0
        %2228 = vmatprep.subr.bf16.mxu0 0
        %2229 = vmatpush1.bf16.msra.mxu0 0
        %2230 = vmatprep.subr.bf16.mxu0 0
        %2231 = vmatpush1.bf16.msra.mxu0 0
        %2232 = vmatprep.subr.bf16.mxu0 0
        %2233 = vmatpush1.bf16.msra.mxu0 0
        %2234 = vmatprep.subr.bf16.mxu0 0
        %2235 = vmatpush1.bf16.msra.mxu0 0
        %2236 = vmatprep.subr.bf16.mxu0 0
        %2237 = vmatpush1.bf16.msra.mxu0 0
        %2238 = vmatprep.subr.bf16.mxu0 0
        %2239 = vmatpush1.bf16.msra.mxu0 0
        %2240 = vmatprep.subr.bf16.mxu0 0
        %2241 = vmatpush1.bf16.msra.mxu0 0
        %2242 = vmatprep.subr.bf16.mxu0 0
        %2243 = vmatpush1.bf16.msra.mxu0 0
        %2244 = vmatprep.subr.bf16.mxu0 0
        %2245 = vmatpush1.bf16.msra.mxu0 0
        %2246 = vmatprep.subr.bf16.mxu0 0
        %2247 = vmatpush1.bf16.msra.mxu0 0
        %2248 = vmatprep.subr.bf16.mxu0 0
        %2249 = vmatpush1.bf16.msra.mxu0 0
        %2250 = vmatprep.mubr.bf16.mxu0 0
        %2251 = vmatmul.mubr.bf16.gmra.mrb[0].mxu0 %v2182
        %v2252 = vpop.f32.mrb[0].mxu0
        %v2253 = vadd.f32 0.0, %v2252
        %v2254 = vpop.f32.mrb[0].mxu0
        %v2255 = vpop.f32.mrb[0].mxu0
        %v2256 = vadd.f32 0.0, %v2255
        %v2257 = vpop.f32.mrb[0].mxu0
        %2258 = vmatprep.mubr.bf16.mxu0 0
        %2259 = vmatmul.mubr.bf16.gmra.mrb[0].mxu0 %v2184
        %v2260 = vpop.f32.mrb[0].mxu0
        %v2261 = vadd.f32 0.0, %v2260
        %v2262 = vpop.f32.mrb[0].mxu0
        %v2263 = vpop.f32.mrb[0].mxu0
        %v2264 = vadd.f32 0.0, %v2263
        %v2265 = vpop.f32.mrb[0].mxu0
        %2266 = vmatprep.mubr.bf16.mxu0 0
        %2267 = vmatmul.mubr.bf16.gmra.mrb[0].mxu0 %v2186
        %v2268 = vpop.f32.mrb[0].mxu0
        %v2269 = vadd.f32 0.0, %v2268
        %v2270 = vpop.f32.mrb[0].mxu0
        %v2271 = vpop.f32.mrb[0].mxu0
        %v2272 = vadd.f32 0.0, %v2271
        %v2273 = vpop.f32.mrb[0].mxu0
        %2274 = vmatprep.mubr.bf16.mxu0 0
        %2275 = vmatmul.mubr.bf16.gmra.mrb[0].mxu0 %v2188
        %v2276 = vpop.f32.mrb[0].mxu0
        %v2277 = vadd.f32 0.0, %v2276
        %v2278 = vpop.f32.mrb[0].mxu0
        %v2279 = vpop.f32.mrb[0].mxu0
        %v2280 = vadd.f32 0.0, %v2279
        %v2281 = vpop.f32.mrb[0].mxu0
        %2282 = vmatprep.mubr.bf16.mxu0 0
        %2283 = vmatmul.mubr.bf16.gmra.mrb[0].mxu0 %v2190
        %v2284 = vpop.f32.mrb[0].mxu0
        %v2285 = vadd.f32 0.0, %v2284
        %v2286 = vpop.f32.mrb[0].mxu0
        %v2287 = vpop.f32.mrb[0].mxu0
        %v2288 = vadd.f32 0.0, %v2287
        %v2289 = vpop.f32.mrb[0].mxu0
        %2290 = vmatprep.mubr.bf16.mxu0 0
        %2291 = vmatmul.mubr.bf16.gmra.mrb[0].mxu0 %v2192
        %v2292 = vpop.f32.mrb[0].mxu0
        %v2293 = vadd.f32 0.0, %v2292
        %v2294 = vpop.f32.mrb[0].mxu0
        %v2295 = vpop.f32.mrb[0].mxu0
        %v2296 = vadd.f32 0.0, %v2295
        %v2297 = vpop.f32.mrb[0].mxu0
        %2298 = vmatprep.mubr.bf16.mxu0 0
        %2299 = vmatmul.mubr.bf16.gmra.mrb[0].mxu0 %v2194
        %v2300 = vpop.f32.mrb[0].mxu0
        %v2301 = vadd.f32 0.0, %v2300
        %v2302 = vpop.f32.mrb[0].mxu0
        %v2303 = vpop.f32.mrb[0].mxu0
        %v2304 = vadd.f32 0.0, %v2303
        %v2305 = vpop.f32.mrb[0].mxu0
        %2306 = vmatprep.mubr.bf16.mxu0 0
        %2307 = vmatmul.mubr.bf16.gmra.mrb[0].mxu0 %v2196
        %v2308 = vpop.f32.mrb[0].mxu0
        %v2309 = vadd.f32 0.0, %v2308
        %v2310 = vpop.f32.mrb[0].mxu0
        %v2311 = vpop.f32.mrb[0].mxu0
        %v2312 = vadd.f32 0.0, %v2311
        %v2313 = vpop.f32.mrb[0].mxu0
        %2314 = vmatprep.mubr.bf16.mxu0 0
        %2315 = vmatmul.mubr.bf16.gmra.mrb[0].mxu0 %v2198
        %v2316 = vpop.f32.mrb[0].mxu0
        %v2317 = vadd.f32 0.0, %v2316
        %v2318 = vpop.f32.mrb[0].mxu0
        %v2319 = vpop.f32.mrb[0].mxu0
        %v2320 = vadd.f32 0.0, %v2319
        %v2321 = vpop.f32.mrb[0].mxu0
        %2322 = vmatprep.mubr.bf16.mxu0 0
        %2323 = vmatmul.mubr.bf16.gmra.mrb[0].mxu0 %v2200
        %v2324 = vpop.f32.mrb[0].mxu0
        %v2325 = vadd.f32 0.0, %v2324
        %v2326 = vpop.f32.mrb[0].mxu0
        %v2327 = vpop.f32.mrb[0].mxu0
        %v2328 = vadd.f32 0.0, %v2327
        %v2329 = vpop.f32.mrb[0].mxu0
        %2330 = vmatprep.mubr.bf16.mxu0 0
        %2331 = vmatmul.mubr.bf16.gmra.mrb[0].mxu0 %v2202
        %v2332 = vpop.f32.mrb[0].mxu0
        %v2333 = vadd.f32 0.0, %v2332
        %v2334 = vpop.f32.mrb[0].mxu0
        %v2335 = vpop.f32.mrb[0].mxu0
        %v2336 = vadd.f32 0.0, %v2335
        %v2337 = vpop.f32.mrb[0].mxu0
        %2338 = vmatprep.mubr.bf16.mxu0 0
        %2339 = vmatmul.mubr.bf16.gmra.mrb[0].mxu0 %v2204
        %v2340 = vpop.f32.mrb[0].mxu0
        %v2341 = vadd.f32 0.0, %v2340
        %v2342 = vpop.f32.mrb[0].mxu0
        %v2343 = vpop.f32.mrb[0].mxu0
        %v2344 = vadd.f32 0.0, %v2343
        %v2345 = vpop.f32.mrb[0].mxu0
        %2346 = vmatprep.mubr.bf16.mxu0 0
        %2347 = vmatmul.mubr.bf16.gmra.mrb[0].mxu0 %v2206
        %v2348 = vpop.f32.mrb[0].mxu0
        %v2349 = vadd.f32 0.0, %v2348
        %v2350 = vpop.f32.mrb[0].mxu0
        %v2351 = vpop.f32.mrb[0].mxu0
        %v2352 = vadd.f32 0.0, %v2351
        %v2353 = vpop.f32.mrb[0].mxu0
        %2354 = vmatprep.mubr.bf16.mxu0 0
        %2355 = vmatmul.mubr.bf16.gmra.mrb[0].mxu0 %v2208
        %v2356 = vpop.f32.mrb[0].mxu0
        %v2357 = vadd.f32 0.0, %v2356
        %v2358 = vpop.f32.mrb[0].mxu0
        %v2359 = vpop.f32.mrb[0].mxu0
        %v2360 = vadd.f32 0.0, %v2359
        %v2361 = vpop.f32.mrb[0].mxu0
        %2362 = vmatprep.mubr.bf16.mxu0 0
        %2363 = vmatmul.mubr.bf16.gmra.mrb[0].mxu0 %v2210
        %v2364 = vpop.f32.mrb[0].mxu0
        %v2365 = vadd.f32 0.0, %v2364
        %v2366 = vpop.f32.mrb[0].mxu0
        %v2367 = vpop.f32.mrb[0].mxu0
        %v2368 = vadd.f32 0.0, %v2367
        %v2369 = vpop.f32.mrb[0].mxu0
        %2370 = vmatprep.mubr.bf16.mxu0 0
        %2371 = vmatmul.mubr.bf16.gmra.mrb[0].mxu0 %v2212
        %v2372 = vpop.f32.mrb[0].mxu0
        %v2373 = vadd.f32 0.0, %v2372
        %v2374 = vpop.f32.mrb[0].mxu0
        %v2375 = vpop.f32.mrb[0].mxu0
        %v2376 = vadd.f32 0.0, %v2375
        %v2377 = vpop.f32.mrb[0].mxu0
        %2378 = vdwg.mxu0
        %v2379 = vld [vmem:[#allocation13] sm:$0x1]
        %v2381 = vlaneseq
        %v2382 = vshrl.u32 %v2381, 7
        %v2383 = vsub.s32 0, %v2382
        %v2384 = vrot.slane %v2379, %v2383
        %v2386 = vmul.f32 %v2253, %v2384
        %v2387 = vmul.f32 %v2256, %v2384
        %v2388 = vmul.f32 %v2261, %v2384
        %v2389 = vmul.f32 %v2264, %v2384
        %v2390 = vmul.f32 %v2269, %v2384
        %v2391 = vmul.f32 %v2272, %v2384
        %v2392 = vmul.f32 %v2277, %v2384
        %v2393 = vmul.f32 %v2280, %v2384
        %v2394 = vmul.f32 %v2285, %v2384
        %v2395 = vmul.f32 %v2288, %v2384
        %v2396 = vmul.f32 %v2293, %v2384
        %v2397 = vmul.f32 %v2296, %v2384
        %v2398 = vmul.f32 %v2301, %v2384
        %v2399 = vmul.f32 %v2304, %v2384
        %v2400 = vmul.f32 %v2309, %v2384
        %v2401 = vmul.f32 %v2312, %v2384
        %v2402 = vmul.f32 %v2317, %v2384
        %v2403 = vmul.f32 %v2320, %v2384
        %v2404 = vmul.f32 %v2325, %v2384
        %v2405 = vmul.f32 %v2328, %v2384
        %v2406 = vmul.f32 %v2333, %v2384
        %v2407 = vmul.f32 %v2336, %v2384
        %v2408 = vmul.f32 %v2341, %v2384
        %v2409 = vmul.f32 %v2344, %v2384
        %v2410 = vmul.f32 %v2349, %v2384
        %v2411 = vmul.f32 %v2352, %v2384
        %v2412 = vmul.f32 %v2357, %v2384
        %v2413 = vmul.f32 %v2360, %v2384
        %v2414 = vmul.f32 %v2365, %v2384
        %v2415 = vmul.f32 %v2368, %v2384
        %v2416 = vmul.f32 %v2373, %v2384
        %v2417 = vmul.f32 %v2376, %v2384
        %v2418 = vld [vmem:[#allocation14] sm:$0x1]
        %v2420 = vlaneseq
        %v2421 = vshrl.u32 %v2420, 7
        %v2422 = vsub.s32 0, %v2421
        %v2423 = vrot.slane %v2418, %v2422
        %v2425 = vadd.f32 %v2386, %v2423
        %v2426 = vadd.f32 %v2387, %v2423
        %v2427 = vadd.f32 %v2388, %v2423
        %v2428 = vadd.f32 %v2389, %v2423
        %v2429 = vadd.f32 %v2390, %v2423
        %v2430 = vadd.f32 %v2391, %v2423
        %v2431 = vadd.f32 %v2392, %v2423
        %v2432 = vadd.f32 %v2393, %v2423
        %v2433 = vadd.f32 %v2394, %v2423
        %v2434 = vadd.f32 %v2395, %v2423
        %v2435 = vadd.f32 %v2396, %v2423
        %v2436 = vadd.f32 %v2397, %v2423
        %v2437 = vadd.f32 %v2398, %v2423
        %v2438 = vadd.f32 %v2399, %v2423
        %v2439 = vadd.f32 %v2400, %v2423
        %v2440 = vadd.f32 %v2401, %v2423
        %v2441 = vadd.f32 %v2402, %v2423
        %v2442 = vadd.f32 %v2403, %v2423
        %v2443 = vadd.f32 %v2404, %v2423
        %v2444 = vadd.f32 %v2405, %v2423
        %v2445 = vadd.f32 %v2406, %v2423
        %v2446 = vadd.f32 %v2407, %v2423
        %v2447 = vadd.f32 %v2408, %v2423
        %v2448 = vadd.f32 %v2409, %v2423
        %v2449 = vadd.f32 %v2410, %v2423
        %v2450 = vadd.f32 %v2411, %v2423
        %v2451 = vadd.f32 %v2412, %v2423
        %v2452 = vadd.f32 %v2413, %v2423
        %v2453 = vadd.f32 %v2414, %v2423
        %v2454 = vadd.f32 %v2415, %v2423
        %v2455 = vadd.f32 %v2416, %v2423
        %v2456 = vadd.f32 %v2417, %v2423
        %v2457 = vmax.f32 %v2425, 0.0
        %v2458 = vmax.f32 %v2426, 0.0
        %v2459 = vmax.f32 %v2427, 0.0
        %v2460 = vmax.f32 %v2428, 0.0
        %v2461 = vmax.f32 %v2429, 0.0
        %v2462 = vmax.f32 %v2430, 0.0
        %v2463 = vmax.f32 %v2431, 0.0
        %v2464 = vmax.f32 %v2432, 0.0
        %v2465 = vmax.f32 %v2433, 0.0
        %v2466 = vmax.f32 %v2434, 0.0
        %v2467 = vmax.f32 %v2435, 0.0
        %v2468 = vmax.f32 %v2436, 0.0
        %v2469 = vmax.f32 %v2437, 0.0
        %v2470 = vmax.f32 %v2438, 0.0
        %v2471 = vmax.f32 %v2439, 0.0
        %v2472 = vmax.f32 %v2440, 0.0
        %v2473 = vmax.f32 %v2441, 0.0
        %v2474 = vmax.f32 %v2442, 0.0
        %v2475 = vmax.f32 %v2443, 0.0
        %v2476 = vmax.f32 %v2444, 0.0
        %v2477 = vmax.f32 %v2445, 0.0
        %v2478 = vmax.f32 %v2446, 0.0
        %v2479 = vmax.f32 %v2447, 0.0
        %v2480 = vmax.f32 %v2448, 0.0
        %v2481 = vmax.f32 %v2449, 0.0
        %v2482 = vmax.f32 %v2450, 0.0
        %v2483 = vmax.f32 %v2451, 0.0
        %v2484 = vmax.f32 %v2452, 0.0
        %v2485 = vmax.f32 %v2453, 0.0
        %v2486 = vmax.f32 %v2454, 0.0
        %v2487 = vmax.f32 %v2455, 0.0
        %v2488 = vmax.f32 %v2456, 0.0
        %v2489 = vsel %vm700, %v2457, 0.0
        %v2490 = vsel %vm700, %v2458, 0.0
        %v2491 = vsel %vm700, %v2459, 0.0
        %v2492 = vsel %vm700, %v2460, 0.0
        %v2493 = vsel %vm700, %v2461, 0.0
        %v2494 = vsel %vm700, %v2462, 0.0
        %v2495 = vsel %vm700, %v2463, 0.0
        %v2496 = vsel %vm700, %v2464, 0.0
        %v2497 = vsel %vm700, %v2465, 0.0
        %v2498 = vsel %vm700, %v2466, 0.0
        %v2499 = vsel %vm700, %v2467, 0.0
        %v2500 = vsel %vm700, %v2468, 0.0
        %v2501 = vsel %vm700, %v2469, 0.0
        %v2502 = vsel %vm700, %v2470, 0.0
        %v2503 = vsel %vm700, %v2471, 0.0
        %v2504 = vsel %vm700, %v2472, 0.0
        %v2505 = vsel %vm700, %v2473, 0.0
        %v2506 = vsel %vm700, %v2474, 0.0
        %v2507 = vsel %vm700, %v2475, 0.0
        %v2508 = vsel %vm700, %v2476, 0.0
        %v2509 = vsel %vm700, %v2477, 0.0
        %v2510 = vsel %vm700, %v2478, 0.0
        %v2511 = vsel %vm700, %v2479, 0.0
        %v2512 = vsel %vm700, %v2480, 0.0
        %v2513 = vsel %vm700, %v2481, 0.0
        %v2514 = vsel %vm700, %v2482, 0.0
        %v2515 = vsel %vm700, %v2483, 0.0
        %v2516 = vsel %vm700, %v2484, 0.0
        %v2517 = vsel %vm700, %v2485, 0.0
        %v2518 = vsel %vm700, %v2486, 0.0
        %v2519 = vsel %vm700, %v2487, 0.0
        %v2520 = vsel %vm700, %v2488, 0.0
        %2521 = vxpose.xlu0.b32.start [1/16] %v2489, 128
        %2522 = vxpose.xlu0.b32.cont [2/16] %v2490, 128
        %2523 = vxpose.xlu0.b32.cont [3/16] %v2491, 128
        %2524 = vxpose.xlu0.b32.cont [4/16] %v2492, 128
        %2525 = vxpose.xlu0.b32.cont [5/16] %v2493, 128
        %2526 = vxpose.xlu0.b32.cont [6/16] %v2494, 128
        %2527 = vxpose.xlu0.b32.cont [7/16] %v2495, 128
        %2528 = vxpose.xlu0.b32.cont [8/16] %v2496, 128
        %2529 = vxpose.xlu0.b32.cont [9/16] %v2497, 128
        %2530 = vxpose.xlu0.b32.cont [10/16] %v2498, 128
        %2531 = vxpose.xlu0.b32.cont [11/16] %v2499, 128
        %2532 = vxpose.xlu0.b32.cont [12/16] %v2500, 128
        %2533 = vxpose.xlu0.b32.cont [13/16] %v2501, 128
        %2534 = vxpose.xlu0.b32.cont [14/16] %v2502, 128
        %2535 = vxpose.xlu0.b32.cont [15/16] %v2503, 128
        %2536 = vxpose.xlu0.b32.end [16/16] %v2504, 128
        %v2537 = vpop.trf.xlu0
        %v2538 = vpop.trf.xlu0
        %v2539 = vpop.trf.xlu0
        %v2540 = vpop.trf.xlu0
        %v2541 = vpop.trf.xlu0
        %v2542 = vpop.trf.xlu0
        %v2543 = vpop.trf.xlu0
        %v2544 = vpop.trf.xlu0
        %v2545 = vpop.trf.xlu0
        %v2546 = vpop.trf.xlu0
        %v2547 = vpop.trf.xlu0
        %v2548 = vpop.trf.xlu0
        %v2549 = vpop.trf.xlu0
        %v2550 = vpop.trf.xlu0
        %v2551 = vpop.trf.xlu0
        %v2552 = vpop.trf.xlu0
        %2553 = vxpose.xlu0.b32.start [1/16] %v2505, 128
        %2554 = vxpose.xlu0.b32.cont [2/16] %v2506, 128
        %2555 = vxpose.xlu0.b32.cont [3/16] %v2507, 128
        %2556 = vxpose.xlu0.b32.cont [4/16] %v2508, 128
        %2557 = vxpose.xlu0.b32.cont [5/16] %v2509, 128
        %2558 = vxpose.xlu0.b32.cont [6/16] %v2510, 128
        %2559 = vxpose.xlu0.b32.cont [7/16] %v2511, 128
        %2560 = vxpose.xlu0.b32.cont [8/16] %v2512, 128
        %2561 = vxpose.xlu0.b32.cont [9/16] %v2513, 128
        %2562 = vxpose.xlu0.b32.cont [10/16] %v2514, 128
        %2563 = vxpose.xlu0.b32.cont [11/16] %v2515, 128
        %2564 = vxpose.xlu0.b32.cont [12/16] %v2516, 128
        %2565 = vxpose.xlu0.b32.cont [13/16] %v2517, 128
        %2566 = vxpose.xlu0.b32.cont [14/16] %v2518, 128
        %2567 = vxpose.xlu0.b32.cont [15/16] %v2519, 128
        %2568 = vxpose.xlu0.b32.end [16/16] %v2520, 128
        %v2569 = vpop.trf.xlu0
        %v2570 = vpop.trf.xlu0
        %v2571 = vpop.trf.xlu0
        %v2572 = vpop.trf.xlu0
        %v2573 = vpop.trf.xlu0
        %v2574 = vpop.trf.xlu0
        %v2575 = vpop.trf.xlu0
        %v2576 = vpop.trf.xlu0
        %v2577 = vpop.trf.xlu0
        %v2578 = vpop.trf.xlu0
        %v2579 = vpop.trf.xlu0
        %v2580 = vpop.trf.xlu0
        %v2581 = vpop.trf.xlu0
        %v2582 = vpop.trf.xlu0
        %v2583 = vpop.trf.xlu0
        %v2584 = vpop.trf.xlu0
        %v2587 = vcombine.low %v2537, %v2569
        %2589 = vst [vmem:[%s442] sm:$0xff] %v2587
        %s2590 = sand.u32 %s217, 1
        %s2591 = scalar_lea.sflag [#allocation4], %s2590
        %s2592 = sand.u32 %s217, 1
        %s2593 = smul.addr %s2592, 8
        %s2594 = scalar_lea.vmem [#allocation16], %s2593
        // Predicated region
        $region85: #{upsampling_forward.1} parent=51 // pred_check
          %p2595 = pneg %p227
        $region86: #{upsampling_forward.1} parent=51 // pred_check_branch
          %2597 = sbr.rel (%p2595) target = $region88
        $region87: #{upsampling_forward.1} parent=51 // pred_region
          %s2599 = ssub.s32 128, 128
          %2600 = vsyncadd %s2591, %s2599
          %s2601 = smul.addr %s31, 2
          %s2602 = smul.addr %s2601, 64
          %s2603 = scalar_lea.hbm %s8, %s2602
          %s2605 = sshll.u32 %s2594, 4
          %s2606 = int_to_ptr.vmem [resolvable:$true] %s2605
          %2608 = dma.vmem_to_hbm [thread:$0]  %s2606, 128, %s2603, %s2591
        $region88: #{upsampling_forward.1} parent=51 // pred_fallthru
          _
      $region52: #{upsampling_forward.1} parent=5 // pred_fallthru
        _
      %p2609 = scmp.le.s32.totalorder 2, %s26
      // Predicated region
      $region89: #{upsampling_forward.1} parent=5 // pred_check
        %p2610 = pneg %p2609
      $region90: #{upsampling_forward.1} parent=5 // pred_check_branch
        %2612 = sbr.rel (%p2610) target = $region92
      $region91: #{upsampling_forward.1} parent=5 // pred_region
        %s2613 = ssub.s32 %s26, 2
        // Predicated region
        $region93: #{upsampling_forward.1} parent=91 // pred_check
          %p2614 = pneg %p233
        $region94: #{upsampling_forward.1} parent=91 // pred_check_branch
          %2616 = sbr.rel (%p2614) target = $region96
        $region95: #{upsampling_forward.1} parent=91 // pred_region
          %s2617 = sand.u32 %s218, 1
          %s2618 = scalar_lea.sflag [#allocation4], %s2617
          %s2619 = sand.u32 %s218, 1
          %s2620 = smul.addr %s2619, 8
          %s2621 = scalar_lea.vmem [#allocation16], %s2620
          %2622 = dma.done %s2618, 128
        $region96: #{upsampling_forward.1} parent=91 // pred_fallthru
          _
      $region92: #{upsampling_forward.1} parent=5 // pred_fallthru
        _
    $region6: #{upsampling_forward.1} parent=1 // loop_footer
      %s30 = sadd.s32 1, %s26
    $region7: #{upsampling_forward.1} parent=1 // loop_footer_branch
      %25 = sbr.rel target = $region3
    $region8: #{upsampling_forward.1} parent=1 // loop_exit
      _
    %2623 = vsyncpa [#allocation3], 1
    %s2624 = scalar_lea.sflag [#allocation3], 1
    %2625 = vsyncpa %s2624, 1
    %2626 = vsyncpa [#allocation6], 1
    %s2627 = scalar_lea.sflag [#allocation6], 1
    %2628 = vsyncpa %s2627, 1
    %2629 = vsyncpa [#allocation9], 1
    %2630 = vsyncpa [#allocation12], 1
    %2631 = vsyncpa [#allocation15], 1
    %2632 = vsyncpa [#allocation4], 1
    %s2633 = scalar_lea.sflag [#allocation4], 1
    %2634 = vsyncpa %s2633, 1

</llo_original>
